<compile_context>
chip_gen: v5e
topology: v5e:2x2
jax: 0.10.0
libtpu: 0.0.40
codegen_flags: <defaults>
</compile_context>

<pallas_src>
import functools

import numpy as np
import jax
import jax.numpy as jnp
from jax import lax
from jax.experimental import pallas as pl
from jax.experimental.pallas import tpu as pltpu


def _make_tap_masks(H, W):
    """(9, H*W) float32 validity masks; tap order (dh, dw) row-major."""
    m = np.zeros((9, H, W), np.float32)
    t = 0
    for dh in (-1, 0, 1):
        for dw in (-1, 0, 1):
            m[t, max(0, -dh):min(H, H - dh), max(0, -dw):min(W, W - dw)] = 1.0
            t += 1
    return m.reshape(9, H * W)


def _vmem_limit_bytes(C, HW):
    """Scoped-VMEM limit derived from the actual resident data (not a constant);
    capped below v7x's 64 MiB physical VMEM, floor of 8 MiB."""
    f32, bf16 = 4, 2
    slab = C * HW * f32
    resident = (2 * slab                 # x block, double-buffered
                + 2 * slab               # out block, double-buffered
                + 9 * HW * f32           # boundary masks (single-buffered)
                + 2 * 9 * C * C * bf16   # w1/w2 tap matrices (single-buffered)
                + 4 * C * f32)           # gamma/beta x2
    working = 6 * slab                   # in-kernel f32 activations / accumulators
    need = resident + working
    return int(min(max(2 * need, 8 * (1 << 20)), 56 * (1 << 20)))


def _make_resnet_block_kernel(H, W, C, G, eps):
    HW = H * W
    Cg = C // G
    n_per_group = float(Cg * HW)

    def conv3x3(x, w_ref, m_ref):
        """x: (C, HW) f32 -> (C, HW) f32; 3x3 SAME conv, no bias.

        Tap-accumulation: for each of the 9 taps, lane-roll the slab (XLU),
        zero the wrapped boundary pixels with a precomputed 0/1 mask (VPU),
        cast to bf16 and accumulate one MXU matmul (K = Cin) in f32."""
        acc = None
        t = 0
        for dh in (-1, 0, 1):
            for dw in (-1, 0, 1):
                d = dh * W + dw
                shifted = x if d == 0 else pltpu.roll(x, (-d) % HW, 1)
                tap = (shifted * m_ref[t:t + 1, :]).astype(jnp.bfloat16)
                part = jnp.dot(w_ref[t], tap,
                               preferred_element_type=jnp.float32)
                acc = part if acc is None else acc + part
                t += 1
        return acc

    def group_norm(y, g_ref, b_ref):
        """y: (C, HW); per-image two-pass group statistics (mean, centered var)."""
        yg = y.reshape(G, Cg, HW)
        s = jnp.sum(jnp.sum(yg, axis=2, keepdims=True), axis=1, keepdims=True)
        mean = s / n_per_group
        d = yg - mean
        ss = jnp.sum(jnp.sum(d * d, axis=2, keepdims=True), axis=1, keepdims=True)
        inv = lax.rsqrt(ss / n_per_group + eps)
        yn = (d * inv).reshape(C, HW)
        return yn * g_ref[...] + b_ref[...]

    def kernel(x_ref, m_ref, w1_ref, g1_ref, b1_ref, w2_ref, g2_ref, b2_ref,
               o_ref):
        x = x_ref[0].astype(jnp.float32)              # (C, HW), lane-dense

        h = conv3x3(x, w1_ref, m_ref)                 # conv1 (bf16 MXU, f32 acc)
        h = group_norm(h, g1_ref, b1_ref)             # gn1
        h = h * jax.nn.sigmoid(h)                     # SiLU

        h = conv3x3(h, w2_ref, m_ref)                 # conv2
        h = group_norm(h, g2_ref, b2_ref)             # gn2
        h = h + x                                     # += identity (f32)
        h = h * jax.nn.sigmoid(h)                     # SiLU

        o_ref[0] = h.astype(o_ref.dtype)              # lane-dense store

    return kernel


def prepare_resnet_block_params(params):
    """One-time weight prep (hoisted out of the per-forward path).

    HWIO conv weights (3, 3, Cin, Cout) -> per-tap (9, Cout, Cin) bf16 matrices
    in (kh, kw) row-major tap order (matches the kernel's (dh, dw) loop).
    GroupNorm affine vectors -> (C, 1) f32 columns."""
    w1, g1, b1, w2, g2, b2 = params
    Cin, Cout = w1.shape[2], w1.shape[3]
    w1t = jnp.transpose(w1, (0, 1, 3, 2)).reshape(9, Cout, Cin).astype(jnp.bfloat16)
    w2t = jnp.transpose(w2, (0, 1, 3, 2)).reshape(9, Cout, Cout).astype(jnp.bfloat16)
    aff = lambda v: v.reshape(-1, 1).astype(jnp.float32)
    return (w1t, aff(g1), aff(b1), w2t, aff(g2), aff(b2))


def resnet_block_forward(x_nchw, prepared, *, num_groups, eps=1e-5):
    """x_nchw: (N, C, H, W) like the PyTorch module; prepared from
    prepare_resnet_block_params()."""
    w1t, g1, b1, w2t, g2, b2 = prepared
    N, Cin, H, W = x_nchw.shape
    Cout = w1t.shape[1]
    HW = H * W
    assert Cin == Cout, ("identity residual requires Cin == Cout "
                         "(downsample path not implemented)")
    assert Cout % num_groups == 0, "num_groups must divide out_channels"
    assert HW % 128 == 0, "H*W must be a multiple of the 128-lane width"
    C = Cout

    masks = jnp.asarray(_make_tap_masks(H, W))        # (9, HW) f32 constants
    x_flat = x_nchw.reshape(N, C, HW)                 # free reshape (no HBM pass)

    kernel = _make_resnet_block_kernel(H, W, C, num_groups, eps)
    once = pl.Buffered(1)                             # grid-invariant -> 1 VMEM buffer
    c2 = lambda n: (0, 0)
    c3 = lambda n: (0, 0, 0)

    out = pl.pallas_call(
        kernel,
        out_shape=jax.ShapeDtypeStruct((N, C, HW), x_nchw.dtype),
        grid=(N,),
        in_specs=[
            pl.BlockSpec((1, C, HW), lambda n: (n, 0, 0)),        # x (per batch)
            pl.BlockSpec((9, HW), c2, pipeline_mode=once),        # tap boundary masks
            pl.BlockSpec((9, C, C), c3, pipeline_mode=once),      # w1 taps (bf16)
            pl.BlockSpec((C, 1), c2, pipeline_mode=once),         # gamma1
            pl.BlockSpec((C, 1), c2, pipeline_mode=once),         # beta1
            pl.BlockSpec((9, C, C), c3, pipeline_mode=once),      # w2 taps (bf16)
            pl.BlockSpec((C, 1), c2, pipeline_mode=once),         # gamma2
            pl.BlockSpec((C, 1), c2, pipeline_mode=once),         # beta2
        ],
        out_specs=pl.BlockSpec((1, C, HW), lambda n: (n, 0, 0)),
        compiler_params=pltpu.CompilerParams(
            dimension_semantics=("parallel",),                    # batch across TCs
            vmem_limit_bytes=_vmem_limit_bytes(C, HW)),
    )(x_flat, masks, w1t, g1, b1, w2t, g2, b2)

    return out.reshape(N, C, H, W)                    # free reshape


# ---------------------------------------------------------------------------
# Pure-JAX reference (correctness check)
# ---------------------------------------------------------------------------
def _ref_group_norm(x, gamma, beta, G, eps):
    N, H, W, C = x.shape
    xg = x.reshape(N, H, W, G, C // G)
    mean = xg.mean(axis=(1, 2, 4), keepdims=True)
    var = ((xg - mean) ** 2).mean(axis=(1, 2, 4), keepdims=True)
    xg = (xg - mean) * lax.rsqrt(var + eps)
    return xg.reshape(N, H, W, C) * gamma + beta


def _ref_forward(x_nchw, params, *, num_groups, eps=1e-5, conv_dtype=jnp.float32):
    """Reference. With conv_dtype=bfloat16 it mirrors the kernel's mixed
    precision (bf16 MXU operands, f32 accumulation)."""
    w1, g1, b1, w2, g2, b2 = params
    x = jnp.transpose(x_nchw, (0, 2, 3, 1)).astype(jnp.float32)
    dn = ("NHWC", "HWIO", "NHWC")

    def conv(h, w):
        return lax.conv_general_dilated(
            h.astype(conv_dtype), w.astype(conv_dtype), (1, 1), "SAME",
            dimension_numbers=dn, preferred_element_type=jnp.float32)

    out = conv(x, w1)
    out = _ref_group_norm(out, g1, b1, num_groups, eps)
    out = out * jax.nn.sigmoid(out)
    out = conv(out, w2)
    out = _ref_group_norm(out, g2, b2, num_groups, eps)
    out = out + x
    out = out * jax.nn.sigmoid(out)
    return jnp.transpose(out, (0, 3, 1, 2))


if __name__ == "__main__":
    # Small shapes consistent with the module: N=2, Cin=Cout=4, 16x16 spatial.
    N, Cin, Cout, H, W = 2, 4, 4, 16, 16
    num_groups = max(Cout // 16, 1)          # matches the PyTorch __init__ (== 1)

    key = jax.random.PRNGKey(0)
    kx, kw1, kw2, kg1, kb1, kg2, kb2 = jax.random.split(key, 7)

    x = jax.random.normal(kx, (N, Cin, H, W), jnp.float32)
    # Conv weights in HWIO layout (3, 3, Cin, Cout), no bias.
    w1 = 0.1 * jax.random.normal(kw1, (3, 3, Cin, Cout), jnp.float32)
    w2 = 0.1 * jax.random.normal(kw2, (3, 3, Cout, Cout), jnp.float32)
    # GroupNorm affine params (slightly off the default 1/0).
    g1 = 1.0 + 0.1 * jax.random.normal(kg1, (Cout,), jnp.float32)
    b1 = 0.1 * jax.random.normal(kb1, (Cout,), jnp.float32)
    g2 = 1.0 + 0.1 * jax.random.normal(kg2, (Cout,), jnp.float32)
    b2 = 0.1 * jax.random.normal(kb2, (Cout,), jnp.float32)
    params = (w1, g1, b1, w2, g2, b2)

    prepared = prepare_resnet_block_params(params)   # one-time weight prep (hoisted)
    fwd = jax.jit(functools.partial(resnet_block_forward, num_groups=num_groups))
    out = jax.block_until_ready(fwd(x, prepared))
    assert out.shape == (N, Cout, H, W)

    # Compare against a reference using the same mixed precision (bf16 conv
    # operands, f32 accumulation) so the check isolates structural correctness
    # (tap order, masks/halo, GroupNorm, SiLU, residual).
    ref = _ref_forward(x, params, num_groups=num_groups, conv_dtype=jnp.bfloat16)
    err = float(jnp.max(jnp.abs(out - ref)))
    assert jnp.allclose(out, ref, atol=1e-2, rtol=1e-2), err

    # Sanity: mixed-precision drift vs the pure-f32 module semantics stays small.
    ref_f32 = _ref_forward(x, params, num_groups=num_groups)
    assert float(jnp.max(jnp.abs(out - ref_f32))) < 0.15

    print("KERNEL_OK")
</pallas_src>

<mosaic_0001>
module attributes {stable_mosaic.version = 11 : i64} {
  func.func @kernel(%arg0: i32, %arg1: memref<1x4x256xf32, #tpu.memory_space<vmem>>, %arg2: memref<9x256xf32, #tpu.memory_space<vmem>>, %arg3: memref<9x4x4xbf16, #tpu.memory_space<vmem>>, %arg4: memref<4x1xf32, #tpu.memory_space<vmem>>, %arg5: memref<4x1xf32, #tpu.memory_space<vmem>>, %arg6: memref<9x4x4xbf16, #tpu.memory_space<vmem>>, %arg7: memref<4x1xf32, #tpu.memory_space<vmem>>, %arg8: memref<4x1xf32, #tpu.memory_space<vmem>>, %arg9: memref<1x4x256xf32, #tpu.memory_space<vmem>>) attributes {dimension_semantics = [#tpu.dimension_semantics<parallel>], iteration_bounds = array<i64: 2>, scalar_prefetch = 0 : i64, scratch_operands = 0 : i64, tpu.core_type = #tpu.core_type<tc>, window_params = [{transform_indices = @transform_0, window_bounds = array<i64: 1, 4, 256>}, {pipeline_mode = #tpu.pipeline_mode<synchronous>, transform_indices = @transform_1, window_bounds = array<i64: 9, 256>}, {pipeline_mode = #tpu.pipeline_mode<synchronous>, transform_indices = @transform_2, window_bounds = array<i64: 9, 4, 4>}, {pipeline_mode = #tpu.pipeline_mode<synchronous>, transform_indices = @transform_3, window_bounds = array<i64: 4, 1>}, {pipeline_mode = #tpu.pipeline_mode<synchronous>, transform_indices = @transform_4, window_bounds = array<i64: 4, 1>}, {pipeline_mode = #tpu.pipeline_mode<synchronous>, transform_indices = @transform_5, window_bounds = array<i64: 9, 4, 4>}, {pipeline_mode = #tpu.pipeline_mode<synchronous>, transform_indices = @transform_6, window_bounds = array<i64: 4, 1>}, {pipeline_mode = #tpu.pipeline_mode<synchronous>, transform_indices = @transform_7, window_bounds = array<i64: 4, 1>}, {transform_indices = @transform_8, window_bounds = array<i64: 1, 4, 256>}]} {
    %c0 = arith.constant 0 : index
    %c0_0 = arith.constant 0 : index
    %c0_1 = arith.constant 0 : index
    %0 = vector.load %arg1[%c0, %c0_0, %c0_1] : memref<1x4x256xf32, #tpu.memory_space<vmem>>, vector<1x4x256xf32>
    %1 = vector.shape_cast %0 : vector<1x4x256xf32> to vector<4x256xf32>
    %c17_i32 = arith.constant 17 : i32
    %2 = tpu.dynamic_rotate %1 by %c17_i32 dim 1 : vector<4x256xf32>, i32 -> vector<4x256xf32>
    %c0_2 = arith.constant 0 : index
    %c0_3 = arith.constant 0 : index
    %3 = vector.load %arg2[%c0_2, %c0_3] : memref<9x256xf32, #tpu.memory_space<vmem>>, vector<1x256xf32>
    %4 = vector.broadcast %3 : vector<1x256xf32> to vector<4x256xf32>
    %5 = arith.mulf %2, %4 : vector<4x256xf32>
    %6 = arith.truncf %5 : vector<4x256xf32> to vector<4x256xbf16>
    %c0_4 = arith.constant 0 : index
    %c0_5 = arith.constant 0 : index
    %c0_6 = arith.constant 0 : index
    %7 = vector.load %arg3[%c0_4, %c0_5, %c0_6] : memref<9x4x4xbf16, #tpu.memory_space<vmem>>, vector<1x4x4xbf16>
    %8 = vector.shape_cast %7 : vector<1x4x4xbf16> to vector<4x4xbf16>
    %cst = arith.constant dense<0.000000e+00> : vector<4x256xf32>
    %9 = tpu.matmul %8, %6, %cst {dimension_numbers = #tpu.dot_dimension_numbers<[1], [0], [0], [1], [0, 0, 1, 1], [], []>} : vector<4x4xbf16>, vector<4x256xbf16>, vector<4x256xf32> -> vector<4x256xf32>
    %c16_i32 = arith.constant 16 : i32
    %10 = tpu.dynamic_rotate %1 by %c16_i32 dim 1 : vector<4x256xf32>, i32 -> vector<4x256xf32>
    %c1 = arith.constant 1 : index
    %c0_7 = arith.constant 0 : index
    %11 = vector.load %arg2[%c1, %c0_7] : memref<9x256xf32, #tpu.memory_space<vmem>>, vector<1x256xf32>
    %12 = vector.broadcast %11 : vector<1x256xf32> to vector<4x256xf32>
    %13 = arith.mulf %10, %12 : vector<4x256xf32>
    %14 = arith.truncf %13 : vector<4x256xf32> to vector<4x256xbf16>
    %c1_8 = arith.constant 1 : index
    %c0_9 = arith.constant 0 : index
    %c0_10 = arith.constant 0 : index
    %15 = vector.load %arg3[%c1_8, %c0_9, %c0_10] : memref<9x4x4xbf16, #tpu.memory_space<vmem>>, vector<1x4x4xbf16>
    %16 = vector.shape_cast %15 : vector<1x4x4xbf16> to vector<4x4xbf16>
    %cst_11 = arith.constant dense<0.000000e+00> : vector<4x256xf32>
    %17 = tpu.matmul %16, %14, %cst_11 {dimension_numbers = #tpu.dot_dimension_numbers<[1], [0], [0], [1], [0, 0, 1, 1], [], []>} : vector<4x4xbf16>, vector<4x256xbf16>, vector<4x256xf32> -> vector<4x256xf32>
    %18 = arith.addf %9, %17 : vector<4x256xf32>
    %c15_i32 = arith.constant 15 : i32
    %19 = tpu.dynamic_rotate %1 by %c15_i32 dim 1 : vector<4x256xf32>, i32 -> vector<4x256xf32>
    %c2 = arith.constant 2 : index
    %c0_12 = arith.constant 0 : index
    %20 = vector.load %arg2[%c2, %c0_12] : memref<9x256xf32, #tpu.memory_space<vmem>>, vector<1x256xf32>
    %21 = vector.broadcast %20 : vector<1x256xf32> to vector<4x256xf32>
    %22 = arith.mulf %19, %21 : vector<4x256xf32>
    %23 = arith.truncf %22 : vector<4x256xf32> to vector<4x256xbf16>
    %c2_13 = arith.constant 2 : index
    %c0_14 = arith.constant 0 : index
    %c0_15 = arith.constant 0 : index
    %24 = vector.load %arg3[%c2_13, %c0_14, %c0_15] : memref<9x4x4xbf16, #tpu.memory_space<vmem>>, vector<1x4x4xbf16>
    %25 = vector.shape_cast %24 : vector<1x4x4xbf16> to vector<4x4xbf16>
    %cst_16 = arith.constant dense<0.000000e+00> : vector<4x256xf32>
    %26 = tpu.matmul %25, %23, %cst_16 {dimension_numbers = #tpu.dot_dimension_numbers<[1], [0], [0], [1], [0, 0, 1, 1], [], []>} : vector<4x4xbf16>, vector<4x256xbf16>, vector<4x256xf32> -> vector<4x256xf32>
    %27 = arith.addf %18, %26 : vector<4x256xf32>
    %c1_i32 = arith.constant 1 : i32
    %28 = tpu.dynamic_rotate %1 by %c1_i32 dim 1 : vector<4x256xf32>, i32 -> vector<4x256xf32>
    %c3 = arith.constant 3 : index
    %c0_17 = arith.constant 0 : index
    %29 = vector.load %arg2[%c3, %c0_17] : memref<9x256xf32, #tpu.memory_space<vmem>>, vector<1x256xf32>
    %30 = vector.broadcast %29 : vector<1x256xf32> to vector<4x256xf32>
    %31 = arith.mulf %28, %30 : vector<4x256xf32>
    %32 = arith.truncf %31 : vector<4x256xf32> to vector<4x256xbf16>
    %c3_18 = arith.constant 3 : index
    %c0_19 = arith.constant 0 : index
    %c0_20 = arith.constant 0 : index
    %33 = vector.load %arg3[%c3_18, %c0_19, %c0_20] : memref<9x4x4xbf16, #tpu.memory_space<vmem>>, vector<1x4x4xbf16>
    %34 = vector.shape_cast %33 : vector<1x4x4xbf16> to vector<4x4xbf16>
    %cst_21 = arith.constant dense<0.000000e+00> : vector<4x256xf32>
    %35 = tpu.matmul %34, %32, %cst_21 {dimension_numbers = #tpu.dot_dimension_numbers<[1], [0], [0], [1], [0, 0, 1, 1], [], []>} : vector<4x4xbf16>, vector<4x256xbf16>, vector<4x256xf32> -> vector<4x256xf32>
    %36 = arith.addf %27, %35 : vector<4x256xf32>
    %c4 = arith.constant 4 : index
    %c0_22 = arith.constant 0 : index
    %37 = vector.load %arg2[%c4, %c0_22] : memref<9x256xf32, #tpu.memory_space<vmem>>, vector<1x256xf32>
    %38 = vector.broadcast %37 : vector<1x256xf32> to vector<4x256xf32>
    %39 = arith.mulf %1, %38 : vector<4x256xf32>
    %40 = arith.truncf %39 : vector<4x256xf32> to vector<4x256xbf16>
    %c4_23 = arith.constant 4 : index
    %c0_24 = arith.constant 0 : index
    %c0_25 = arith.constant 0 : index
    %41 = vector.load %arg3[%c4_23, %c0_24, %c0_25] : memref<9x4x4xbf16, #tpu.memory_space<vmem>>, vector<1x4x4xbf16>
    %42 = vector.shape_cast %41 : vector<1x4x4xbf16> to vector<4x4xbf16>
    %cst_26 = arith.constant dense<0.000000e+00> : vector<4x256xf32>
    %43 = tpu.matmul %42, %40, %cst_26 {dimension_numbers = #tpu.dot_dimension_numbers<[1], [0], [0], [1], [0, 0, 1, 1], [], []>} : vector<4x4xbf16>, vector<4x256xbf16>, vector<4x256xf32> -> vector<4x256xf32>
    %44 = arith.addf %36, %43 : vector<4x256xf32>
    %c255_i32 = arith.constant 255 : i32
    %45 = tpu.dynamic_rotate %1 by %c255_i32 dim 1 : vector<4x256xf32>, i32 -> vector<4x256xf32>
    %c5 = arith.constant 5 : index
    %c0_27 = arith.constant 0 : index
    %46 = vector.load %arg2[%c5, %c0_27] : memref<9x256xf32, #tpu.memory_space<vmem>>, vector<1x256xf32>
    %47 = vector.broadcast %46 : vector<1x256xf32> to vector<4x256xf32>
    %48 = arith.mulf %45, %47 : vector<4x256xf32>
    %49 = arith.truncf %48 : vector<4x256xf32> to vector<4x256xbf16>
    %c5_28 = arith.constant 5 : index
    %c0_29 = arith.constant 0 : index
    %c0_30 = arith.constant 0 : index
    %50 = vector.load %arg3[%c5_28, %c0_29, %c0_30] : memref<9x4x4xbf16, #tpu.memory_space<vmem>>, vector<1x4x4xbf16>
    %51 = vector.shape_cast %50 : vector<1x4x4xbf16> to vector<4x4xbf16>
    %cst_31 = arith.constant dense<0.000000e+00> : vector<4x256xf32>
    %52 = tpu.matmul %51, %49, %cst_31 {dimension_numbers = #tpu.dot_dimension_numbers<[1], [0], [0], [1], [0, 0, 1, 1], [], []>} : vector<4x4xbf16>, vector<4x256xbf16>, vector<4x256xf32> -> vector<4x256xf32>
    %53 = arith.addf %44, %52 : vector<4x256xf32>
    %c241_i32 = arith.constant 241 : i32
    %54 = tpu.dynamic_rotate %1 by %c241_i32 dim 1 : vector<4x256xf32>, i32 -> vector<4x256xf32>
    %c6 = arith.constant 6 : index
    %c0_32 = arith.constant 0 : index
    %55 = vector.load %arg2[%c6, %c0_32] : memref<9x256xf32, #tpu.memory_space<vmem>>, vector<1x256xf32>
    %56 = vector.broadcast %55 : vector<1x256xf32> to vector<4x256xf32>
    %57 = arith.mulf %54, %56 : vector<4x256xf32>
    %58 = arith.truncf %57 : vector<4x256xf32> to vector<4x256xbf16>
    %c6_33 = arith.constant 6 : index
    %c0_34 = arith.constant 0 : index
    %c0_35 = arith.constant 0 : index
    %59 = vector.load %arg3[%c6_33, %c0_34, %c0_35] : memref<9x4x4xbf16, #tpu.memory_space<vmem>>, vector<1x4x4xbf16>
    %60 = vector.shape_cast %59 : vector<1x4x4xbf16> to vector<4x4xbf16>
    %cst_36 = arith.constant dense<0.000000e+00> : vector<4x256xf32>
    %61 = tpu.matmul %60, %58, %cst_36 {dimension_numbers = #tpu.dot_dimension_numbers<[1], [0], [0], [1], [0, 0, 1, 1], [], []>} : vector<4x4xbf16>, vector<4x256xbf16>, vector<4x256xf32> -> vector<4x256xf32>
    %62 = arith.addf %53, %61 : vector<4x256xf32>
    %c240_i32 = arith.constant 240 : i32
    %63 = tpu.dynamic_rotate %1 by %c240_i32 dim 1 : vector<4x256xf32>, i32 -> vector<4x256xf32>
    %c7 = arith.constant 7 : index
    %c0_37 = arith.constant 0 : index
    %64 = vector.load %arg2[%c7, %c0_37] : memref<9x256xf32, #tpu.memory_space<vmem>>, vector<1x256xf32>
    %65 = vector.broadcast %64 : vector<1x256xf32> to vector<4x256xf32>
    %66 = arith.mulf %63, %65 : vector<4x256xf32>
    %67 = arith.truncf %66 : vector<4x256xf32> to vector<4x256xbf16>
    %c7_38 = arith.constant 7 : index
    %c0_39 = arith.constant 0 : index
    %c0_40 = arith.constant 0 : index
    %68 = vector.load %arg3[%c7_38, %c0_39, %c0_40] : memref<9x4x4xbf16, #tpu.memory_space<vmem>>, vector<1x4x4xbf16>
    %69 = vector.shape_cast %68 : vector<1x4x4xbf16> to vector<4x4xbf16>
    %cst_41 = arith.constant dense<0.000000e+00> : vector<4x256xf32>
    %70 = tpu.matmul %69, %67, %cst_41 {dimension_numbers = #tpu.dot_dimension_numbers<[1], [0], [0], [1], [0, 0, 1, 1], [], []>} : vector<4x4xbf16>, vector<4x256xbf16>, vector<4x256xf32> -> vector<4x256xf32>
    %71 = arith.addf %62, %70 : vector<4x256xf32>
    %c239_i32 = arith.constant 239 : i32
    %72 = tpu.dynamic_rotate %1 by %c239_i32 dim 1 : vector<4x256xf32>, i32 -> vector<4x256xf32>
    %c8 = arith.constant 8 : index
    %c0_42 = arith.constant 0 : index
    %73 = vector.load %arg2[%c8, %c0_42] : memref<9x256xf32, #tpu.memory_space<vmem>>, vector<1x256xf32>
    %74 = vector.broadcast %73 : vector<1x256xf32> to vector<4x256xf32>
    %75 = arith.mulf %72, %74 : vector<4x256xf32>
    %76 = arith.truncf %75 : vector<4x256xf32> to vector<4x256xbf16>
    %c8_43 = arith.constant 8 : index
    %c0_44 = arith.constant 0 : index
    %c0_45 = arith.constant 0 : index
    %77 = vector.load %arg3[%c8_43, %c0_44, %c0_45] : memref<9x4x4xbf16, #tpu.memory_space<vmem>>, vector<1x4x4xbf16>
    %78 = vector.shape_cast %77 : vector<1x4x4xbf16> to vector<4x4xbf16>
    %cst_46 = arith.constant dense<0.000000e+00> : vector<4x256xf32>
    %79 = tpu.matmul %78, %76, %cst_46 {dimension_numbers = #tpu.dot_dimension_numbers<[1], [0], [0], [1], [0, 0, 1, 1], [], []>} : vector<4x4xbf16>, vector<4x256xbf16>, vector<4x256xf32> -> vector<4x256xf32>
    %80 = arith.addf %71, %79 : vector<4x256xf32>
    %81 = vector.shape_cast %80 : vector<4x256xf32> to vector<1x4x256xf32>
    %cst_47 = arith.constant dense<0.000000e+00> : vector<1x4xf32>
    %82 = vector.multi_reduction <add>, %81, %cst_47 [2] : vector<1x4x256xf32> to vector<1x4xf32>
    %83 = vector.shape_cast %82 : vector<1x4xf32> to vector<1x4x1xf32>
    %cst_48 = arith.constant dense<0.000000e+00> : vector<1x1xf32>
    %84 = vector.multi_reduction <add>, %83, %cst_48 [1] : vector<1x4x1xf32> to vector<1x1xf32>
    %85 = vector.shape_cast %84 : vector<1x1xf32> to vector<1x1x1xf32>
    %cst_49 = arith.constant 1.024000e+03 : f32
    %86 = vector.broadcast %cst_49 : f32 to vector<1x1x1xf32>
    %87 = arith.divf %85, %86 : vector<1x1x1xf32>
    %88 = vector.broadcast %87 : vector<1x1x1xf32> to vector<1x4x256xf32>
    %89 = arith.subf %81, %88 : vector<1x4x256xf32>
    %90 = arith.mulf %89, %89 : vector<1x4x256xf32>
    %cst_50 = arith.constant dense<0.000000e+00> : vector<1x4xf32>
    %91 = vector.multi_reduction <add>, %90, %cst_50 [2] : vector<1x4x256xf32> to vector<1x4xf32>
    %92 = vector.shape_cast %91 : vector<1x4xf32> to vector<1x4x1xf32>
    %cst_51 = arith.constant dense<0.000000e+00> : vector<1x1xf32>
    %93 = vector.multi_reduction <add>, %92, %cst_51 [1] : vector<1x4x1xf32> to vector<1x1xf32>
    %94 = vector.shape_cast %93 : vector<1x1xf32> to vector<1x1x1xf32>
    %cst_52 = arith.constant 1.024000e+03 : f32
    %95 = vector.broadcast %cst_52 : f32 to vector<1x1x1xf32>
    %96 = arith.divf %94, %95 : vector<1x1x1xf32>
    %cst_53 = arith.constant 9.99999974E-6 : f32
    %97 = vector.broadcast %cst_53 : f32 to vector<1x1x1xf32>
    %98 = arith.addf %96, %97 : vector<1x1x1xf32>
    %99 = math.rsqrt %98 : vector<1x1x1xf32>
    %100 = vector.broadcast %99 : vector<1x1x1xf32> to vector<1x4x256xf32>
    %101 = arith.mulf %89, %100 : vector<1x4x256xf32>
    %102 = vector.shape_cast %101 : vector<1x4x256xf32> to vector<4x256xf32>
    %c0_54 = arith.constant 0 : index
    %c0_55 = arith.constant 0 : index
    %103 = vector.load %arg4[%c0_54, %c0_55] : memref<4x1xf32, #tpu.memory_space<vmem>>, vector<4x1xf32>
    %104 = vector.broadcast %103 : vector<4x1xf32> to vector<4x256xf32>
    %105 = arith.mulf %102, %104 : vector<4x256xf32>
    %c0_56 = arith.constant 0 : index
    %c0_57 = arith.constant 0 : index
    %106 = vector.load %arg5[%c0_56, %c0_57] : memref<4x1xf32, #tpu.memory_space<vmem>>, vector<4x1xf32>
    %107 = vector.broadcast %106 : vector<4x1xf32> to vector<4x256xf32>
    %108 = arith.addf %105, %107 : vector<4x256xf32>
    %109 = arith.negf %108 : vector<4x256xf32>
    %110 = math.exp %109 : vector<4x256xf32>
    %cst_58 = arith.constant 1.000000e+00 : f32
    %111 = vector.broadcast %cst_58 : f32 to vector<4x256xf32>
    %112 = arith.addf %111, %110 : vector<4x256xf32>
    %113 = arith.divf %111, %112 : vector<4x256xf32>
    %114 = arith.mulf %108, %113 : vector<4x256xf32>
    %c17_i32_59 = arith.constant 17 : i32
    %115 = tpu.dynamic_rotate %114 by %c17_i32_59 dim 1 : vector<4x256xf32>, i32 -> vector<4x256xf32>
    %c0_60 = arith.constant 0 : index
    %c0_61 = arith.constant 0 : index
    %116 = vector.load %arg2[%c0_60, %c0_61] : memref<9x256xf32, #tpu.memory_space<vmem>>, vector<1x256xf32>
    %117 = vector.broadcast %116 : vector<1x256xf32> to vector<4x256xf32>
    %118 = arith.mulf %115, %117 : vector<4x256xf32>
    %119 = arith.truncf %118 : vector<4x256xf32> to vector<4x256xbf16>
    %c0_62 = arith.constant 0 : index
    %c0_63 = arith.constant 0 : index
    %c0_64 = arith.constant 0 : index
    %120 = vector.load %arg6[%c0_62, %c0_63, %c0_64] : memref<9x4x4xbf16, #tpu.memory_space<vmem>>, vector<1x4x4xbf16>
    %121 = vector.shape_cast %120 : vector<1x4x4xbf16> to vector<4x4xbf16>
    %cst_65 = arith.constant dense<0.000000e+00> : vector<4x256xf32>
    %122 = tpu.matmul %121, %119, %cst_65 {dimension_numbers = #tpu.dot_dimension_numbers<[1], [0], [0], [1], [0, 0, 1, 1], [], []>} : vector<4x4xbf16>, vector<4x256xbf16>, vector<4x256xf32> -> vector<4x256xf32>
    %c16_i32_66 = arith.constant 16 : i32
    %123 = tpu.dynamic_rotate %114 by %c16_i32_66 dim 1 : vector<4x256xf32>, i32 -> vector<4x256xf32>
    %c1_67 = arith.constant 1 : index
    %c0_68 = arith.constant 0 : index
    %124 = vector.load %arg2[%c1_67, %c0_68] : memref<9x256xf32, #tpu.memory_space<vmem>>, vector<1x256xf32>
    %125 = vector.broadcast %124 : vector<1x256xf32> to vector<4x256xf32>
    %126 = arith.mulf %123, %125 : vector<4x256xf32>
    %127 = arith.truncf %126 : vector<4x256xf32> to vector<4x256xbf16>
    %c1_69 = arith.constant 1 : index
    %c0_70 = arith.constant 0 : index
    %c0_71 = arith.constant 0 : index
    %128 = vector.load %arg6[%c1_69, %c0_70, %c0_71] : memref<9x4x4xbf16, #tpu.memory_space<vmem>>, vector<1x4x4xbf16>
    %129 = vector.shape_cast %128 : vector<1x4x4xbf16> to vector<4x4xbf16>
    %cst_72 = arith.constant dense<0.000000e+00> : vector<4x256xf32>
    %130 = tpu.matmul %129, %127, %cst_72 {dimension_numbers = #tpu.dot_dimension_numbers<[1], [0], [0], [1], [0, 0, 1, 1], [], []>} : vector<4x4xbf16>, vector<4x256xbf16>, vector<4x256xf32> -> vector<4x256xf32>
    %131 = arith.addf %122, %130 : vector<4x256xf32>
    %c15_i32_73 = arith.constant 15 : i32
    %132 = tpu.dynamic_rotate %114 by %c15_i32_73 dim 1 : vector<4x256xf32>, i32 -> vector<4x256xf32>
    %c2_74 = arith.constant 2 : index
    %c0_75 = arith.constant 0 : index
    %133 = vector.load %arg2[%c2_74, %c0_75] : memref<9x256xf32, #tpu.memory_space<vmem>>, vector<1x256xf32>
    %134 = vector.broadcast %133 : vector<1x256xf32> to vector<4x256xf32>
    %135 = arith.mulf %132, %134 : vector<4x256xf32>
    %136 = arith.truncf %135 : vector<4x256xf32> to vector<4x256xbf16>
    %c2_76 = arith.constant 2 : index
    %c0_77 = arith.constant 0 : index
    %c0_78 = arith.constant 0 : index
    %137 = vector.load %arg6[%c2_76, %c0_77, %c0_78] : memref<9x4x4xbf16, #tpu.memory_space<vmem>>, vector<1x4x4xbf16>
    %138 = vector.shape_cast %137 : vector<1x4x4xbf16> to vector<4x4xbf16>
    %cst_79 = arith.constant dense<0.000000e+00> : vector<4x256xf32>
    %139 = tpu.matmul %138, %136, %cst_79 {dimension_numbers = #tpu.dot_dimension_numbers<[1], [0], [0], [1], [0, 0, 1, 1], [], []>} : vector<4x4xbf16>, vector<4x256xbf16>, vector<4x256xf32> -> vector<4x256xf32>
    %140 = arith.addf %131, %139 : vector<4x256xf32>
    %c1_i32_80 = arith.constant 1 : i32
    %141 = tpu.dynamic_rotate %114 by %c1_i32_80 dim 1 : vector<4x256xf32>, i32 -> vector<4x256xf32>
    %c3_81 = arith.constant 3 : index
    %c0_82 = arith.constant 0 : index
    %142 = vector.load %arg2[%c3_81, %c0_82] : memref<9x256xf32, #tpu.memory_space<vmem>>, vector<1x256xf32>
    %143 = vector.broadcast %142 : vector<1x256xf32> to vector<4x256xf32>
    %144 = arith.mulf %141, %143 : vector<4x256xf32>
    %145 = arith.truncf %144 : vector<4x256xf32> to vector<4x256xbf16>
    %c3_83 = arith.constant 3 : index
    %c0_84 = arith.constant 0 : index
    %c0_85 = arith.constant 0 : index
    %146 = vector.load %arg6[%c3_83, %c0_84, %c0_85] : memref<9x4x4xbf16, #tpu.memory_space<vmem>>, vector<1x4x4xbf16>
    %147 = vector.shape_cast %146 : vector<1x4x4xbf16> to vector<4x4xbf16>
    %cst_86 = arith.constant dense<0.000000e+00> : vector<4x256xf32>
    %148 = tpu.matmul %147, %145, %cst_86 {dimension_numbers = #tpu.dot_dimension_numbers<[1], [0], [0], [1], [0, 0, 1, 1], [], []>} : vector<4x4xbf16>, vector<4x256xbf16>, vector<4x256xf32> -> vector<4x256xf32>
    %149 = arith.addf %140, %148 : vector<4x256xf32>
    %c4_87 = arith.constant 4 : index
    %c0_88 = arith.constant 0 : index
    %150 = vector.load %arg2[%c4_87, %c0_88] : memref<9x256xf32, #tpu.memory_space<vmem>>, vector<1x256xf32>
    %151 = vector.broadcast %150 : vector<1x256xf32> to vector<4x256xf32>
    %152 = arith.mulf %114, %151 : vector<4x256xf32>
    %153 = arith.truncf %152 : vector<4x256xf32> to vector<4x256xbf16>
    %c4_89 = arith.constant 4 : index
    %c0_90 = arith.constant 0 : index
    %c0_91 = arith.constant 0 : index
    %154 = vector.load %arg6[%c4_89, %c0_90, %c0_91] : memref<9x4x4xbf16, #tpu.memory_space<vmem>>, vector<1x4x4xbf16>
    %155 = vector.shape_cast %154 : vector<1x4x4xbf16> to vector<4x4xbf16>
    %cst_92 = arith.constant dense<0.000000e+00> : vector<4x256xf32>
    %156 = tpu.matmul %155, %153, %cst_92 {dimension_numbers = #tpu.dot_dimension_numbers<[1], [0], [0], [1], [0, 0, 1, 1], [], []>} : vector<4x4xbf16>, vector<4x256xbf16>, vector<4x256xf32> -> vector<4x256xf32>
    %157 = arith.addf %149, %156 : vector<4x256xf32>
    %c255_i32_93 = arith.constant 255 : i32
    %158 = tpu.dynamic_rotate %114 by %c255_i32_93 dim 1 : vector<4x256xf32>, i32 -> vector<4x256xf32>
    %c5_94 = arith.constant 5 : index
    %c0_95 = arith.constant 0 : index
    %159 = vector.load %arg2[%c5_94, %c0_95] : memref<9x256xf32, #tpu.memory_space<vmem>>, vector<1x256xf32>
    %160 = vector.broadcast %159 : vector<1x256xf32> to vector<4x256xf32>
    %161 = arith.mulf %158, %160 : vector<4x256xf32>
    %162 = arith.truncf %161 : vector<4x256xf32> to vector<4x256xbf16>
    %c5_96 = arith.constant 5 : index
    %c0_97 = arith.constant 0 : index
    %c0_98 = arith.constant 0 : index
    %163 = vector.load %arg6[%c5_96, %c0_97, %c0_98] : memref<9x4x4xbf16, #tpu.memory_space<vmem>>, vector<1x4x4xbf16>
    %164 = vector.shape_cast %163 : vector<1x4x4xbf16> to vector<4x4xbf16>
    %cst_99 = arith.constant dense<0.000000e+00> : vector<4x256xf32>
    %165 = tpu.matmul %164, %162, %cst_99 {dimension_numbers = #tpu.dot_dimension_numbers<[1], [0], [0], [1], [0, 0, 1, 1], [], []>} : vector<4x4xbf16>, vector<4x256xbf16>, vector<4x256xf32> -> vector<4x256xf32>
    %166 = arith.addf %157, %165 : vector<4x256xf32>
    %c241_i32_100 = arith.constant 241 : i32
    %167 = tpu.dynamic_rotate %114 by %c241_i32_100 dim 1 : vector<4x256xf32>, i32 -> vector<4x256xf32>
    %c6_101 = arith.constant 6 : index
    %c0_102 = arith.constant 0 : index
    %168 = vector.load %arg2[%c6_101, %c0_102] : memref<9x256xf32, #tpu.memory_space<vmem>>, vector<1x256xf32>
    %169 = vector.broadcast %168 : vector<1x256xf32> to vector<4x256xf32>
    %170 = arith.mulf %167, %169 : vector<4x256xf32>
    %171 = arith.truncf %170 : vector<4x256xf32> to vector<4x256xbf16>
    %c6_103 = arith.constant 6 : index
    %c0_104 = arith.constant 0 : index
    %c0_105 = arith.constant 0 : index
    %172 = vector.load %arg6[%c6_103, %c0_104, %c0_105] : memref<9x4x4xbf16, #tpu.memory_space<vmem>>, vector<1x4x4xbf16>
    %173 = vector.shape_cast %172 : vector<1x4x4xbf16> to vector<4x4xbf16>
    %cst_106 = arith.constant dense<0.000000e+00> : vector<4x256xf32>
    %174 = tpu.matmul %173, %171, %cst_106 {dimension_numbers = #tpu.dot_dimension_numbers<[1], [0], [0], [1], [0, 0, 1, 1], [], []>} : vector<4x4xbf16>, vector<4x256xbf16>, vector<4x256xf32> -> vector<4x256xf32>
    %175 = arith.addf %166, %174 : vector<4x256xf32>
    %c240_i32_107 = arith.constant 240 : i32
    %176 = tpu.dynamic_rotate %114 by %c240_i32_107 dim 1 : vector<4x256xf32>, i32 -> vector<4x256xf32>
    %c7_108 = arith.constant 7 : index
    %c0_109 = arith.constant 0 : index
    %177 = vector.load %arg2[%c7_108, %c0_109] : memref<9x256xf32, #tpu.memory_space<vmem>>, vector<1x256xf32>
    %178 = vector.broadcast %177 : vector<1x256xf32> to vector<4x256xf32>
    %179 = arith.mulf %176, %178 : vector<4x256xf32>
    %180 = arith.truncf %179 : vector<4x256xf32> to vector<4x256xbf16>
    %c7_110 = arith.constant 7 : index
    %c0_111 = arith.constant 0 : index
    %c0_112 = arith.constant 0 : index
    %181 = vector.load %arg6[%c7_110, %c0_111, %c0_112] : memref<9x4x4xbf16, #tpu.memory_space<vmem>>, vector<1x4x4xbf16>
    %182 = vector.shape_cast %181 : vector<1x4x4xbf16> to vector<4x4xbf16>
    %cst_113 = arith.constant dense<0.000000e+00> : vector<4x256xf32>
    %183 = tpu.matmul %182, %180, %cst_113 {dimension_numbers = #tpu.dot_dimension_numbers<[1], [0], [0], [1], [0, 0, 1, 1], [], []>} : vector<4x4xbf16>, vector<4x256xbf16>, vector<4x256xf32> -> vector<4x256xf32>
    %184 = arith.addf %175, %183 : vector<4x256xf32>
    %c239_i32_114 = arith.constant 239 : i32
    %185 = tpu.dynamic_rotate %114 by %c239_i32_114 dim 1 : vector<4x256xf32>, i32 -> vector<4x256xf32>
    %c8_115 = arith.constant 8 : index
    %c0_116 = arith.constant 0 : index
    %186 = vector.load %arg2[%c8_115, %c0_116] : memref<9x256xf32, #tpu.memory_space<vmem>>, vector<1x256xf32>
    %187 = vector.broadcast %186 : vector<1x256xf32> to vector<4x256xf32>
    %188 = arith.mulf %185, %187 : vector<4x256xf32>
    %189 = arith.truncf %188 : vector<4x256xf32> to vector<4x256xbf16>
    %c8_117 = arith.constant 8 : index
    %c0_118 = arith.constant 0 : index
    %c0_119 = arith.constant 0 : index
    %190 = vector.load %arg6[%c8_117, %c0_118, %c0_119] : memref<9x4x4xbf16, #tpu.memory_space<vmem>>, vector<1x4x4xbf16>
    %191 = vector.shape_cast %190 : vector<1x4x4xbf16> to vector<4x4xbf16>
    %cst_120 = arith.constant dense<0.000000e+00> : vector<4x256xf32>
    %192 = tpu.matmul %191, %189, %cst_120 {dimension_numbers = #tpu.dot_dimension_numbers<[1], [0], [0], [1], [0, 0, 1, 1], [], []>} : vector<4x4xbf16>, vector<4x256xbf16>, vector<4x256xf32> -> vector<4x256xf32>
    %193 = arith.addf %184, %192 : vector<4x256xf32>
    %194 = vector.shape_cast %193 : vector<4x256xf32> to vector<1x4x256xf32>
    %cst_121 = arith.constant dense<0.000000e+00> : vector<1x4xf32>
    %195 = vector.multi_reduction <add>, %194, %cst_121 [2] : vector<1x4x256xf32> to vector<1x4xf32>
    %196 = vector.shape_cast %195 : vector<1x4xf32> to vector<1x4x1xf32>
    %cst_122 = arith.constant dense<0.000000e+00> : vector<1x1xf32>
    %197 = vector.multi_reduction <add>, %196, %cst_122 [1] : vector<1x4x1xf32> to vector<1x1xf32>
    %198 = vector.shape_cast %197 : vector<1x1xf32> to vector<1x1x1xf32>
    %cst_123 = arith.constant 1.024000e+03 : f32
    %199 = vector.broadcast %cst_123 : f32 to vector<1x1x1xf32>
    %200 = arith.divf %198, %199 : vector<1x1x1xf32>
    %201 = vector.broadcast %200 : vector<1x1x1xf32> to vector<1x4x256xf32>
    %202 = arith.subf %194, %201 : vector<1x4x256xf32>
    %203 = arith.mulf %202, %202 : vector<1x4x256xf32>
    %cst_124 = arith.constant dense<0.000000e+00> : vector<1x4xf32>
    %204 = vector.multi_reduction <add>, %203, %cst_124 [2] : vector<1x4x256xf32> to vector<1x4xf32>
    %205 = vector.shape_cast %204 : vector<1x4xf32> to vector<1x4x1xf32>
    %cst_125 = arith.constant dense<0.000000e+00> : vector<1x1xf32>
    %206 = vector.multi_reduction <add>, %205, %cst_125 [1] : vector<1x4x1xf32> to vector<1x1xf32>
    %207 = vector.shape_cast %206 : vector<1x1xf32> to vector<1x1x1xf32>
    %cst_126 = arith.constant 1.024000e+03 : f32
    %208 = vector.broadcast %cst_126 : f32 to vector<1x1x1xf32>
    %209 = arith.divf %207, %208 : vector<1x1x1xf32>
    %cst_127 = arith.constant 9.99999974E-6 : f32
    %210 = vector.broadcast %cst_127 : f32 to vector<1x1x1xf32>
    %211 = arith.addf %209, %210 : vector<1x1x1xf32>
    %212 = math.rsqrt %211 : vector<1x1x1xf32>
    %213 = vector.broadcast %212 : vector<1x1x1xf32> to vector<1x4x256xf32>
    %214 = arith.mulf %202, %213 : vector<1x4x256xf32>
    %215 = vector.shape_cast %214 : vector<1x4x256xf32> to vector<4x256xf32>
    %c0_128 = arith.constant 0 : index
    %c0_129 = arith.constant 0 : index
    %216 = vector.load %arg7[%c0_128, %c0_129] : memref<4x1xf32, #tpu.memory_space<vmem>>, vector<4x1xf32>
    %217 = vector.broadcast %216 : vector<4x1xf32> to vector<4x256xf32>
    %218 = arith.mulf %215, %217 : vector<4x256xf32>
    %c0_130 = arith.constant 0 : index
    %c0_131 = arith.constant 0 : index
    %219 = vector.load %arg8[%c0_130, %c0_131] : memref<4x1xf32, #tpu.memory_space<vmem>>, vector<4x1xf32>
    %220 = vector.broadcast %219 : vector<4x1xf32> to vector<4x256xf32>
    %221 = arith.addf %218, %220 : vector<4x256xf32>
    %222 = arith.addf %221, %1 : vector<4x256xf32>
    %223 = arith.negf %222 : vector<4x256xf32>
    %224 = math.exp %223 : vector<4x256xf32>
    %cst_132 = arith.constant 1.000000e+00 : f32
    %225 = vector.broadcast %cst_132 : f32 to vector<4x256xf32>
    %226 = arith.addf %225, %224 : vector<4x256xf32>
    %227 = arith.divf %225, %226 : vector<4x256xf32>
    %228 = arith.mulf %222, %227 : vector<4x256xf32>
    %c0_133 = arith.constant 0 : index
    %c0_134 = arith.constant 0 : index
    %c0_135 = arith.constant 0 : index
    %229 = vector.load %arg9[%c0_133, %c0_134, %c0_135] : memref<1x4x256xf32, #tpu.memory_space<vmem>>, vector<1x4x256xf32>
    %230 = vector.shape_cast %229 : vector<1x4x256xf32> to vector<4x256xf32>
    %231 = vector.shape_cast %228 : vector<4x256xf32> to vector<1x4x256xf32>
    tpu.vector_store %arg9[%c0_133, %c0_134, %c0_135], %231 {strides = array<i32>} : memref<1x4x256xf32, #tpu.memory_space<vmem>>, vector<1x4x256xf32>,
    return
  }
  func.func @transform_0(%arg0: i32) -> (i32, i32, i32) {
    %c0_i32 = arith.constant 0 : i32
    %c0_i32_0 = arith.constant 0 : i32
    %c0_i32_1 = arith.constant 0 : i32
    return %arg0, %c0_i32, %c0_i32_0 : i32, i32, i32
  }
  func.func @transform_1(%arg0: i32) -> (i32, i32) {
    %c0_i32 = arith.constant 0 : i32
    %c0_i32_0 = arith.constant 0 : i32
    %c0_i32_1 = arith.constant 0 : i32
    return %c0_i32, %c0_i32_0 : i32, i32
  }
  func.func @transform_2(%arg0: i32) -> (i32, i32, i32) {
    %c0_i32 = arith.constant 0 : i32
    %c0_i32_0 = arith.constant 0 : i32
    %c0_i32_1 = arith.constant 0 : i32
    %c0_i32_2 = arith.constant 0 : i32
    return %c0_i32, %c0_i32_0, %c0_i32_1 : i32, i32, i32
  }
  func.func @transform_3(%arg0: i32) -> (i32, i32) {
    %c0_i32 = arith.constant 0 : i32
    %c0_i32_0 = arith.constant 0 : i32
    %c0_i32_1 = arith.constant 0 : i32
    return %c0_i32, %c0_i32_0 : i32, i32
  }
  func.func @transform_4(%arg0: i32) -> (i32, i32) {
    %c0_i32 = arith.constant 0 : i32
    %c0_i32_0 = arith.constant 0 : i32
    %c0_i32_1 = arith.constant 0 : i32
    return %c0_i32, %c0_i32_0 : i32, i32
  }
  func.func @transform_5(%arg0: i32) -> (i32, i32, i32) {
    %c0_i32 = arith.constant 0 : i32
    %c0_i32_0 = arith.constant 0 : i32
    %c0_i32_1 = arith.constant 0 : i32
    %c0_i32_2 = arith.constant 0 : i32
    return %c0_i32, %c0_i32_0, %c0_i32_1 : i32, i32, i32
  }
  func.func @transform_6(%arg0: i32) -> (i32, i32) {
    %c0_i32 = arith.constant 0 : i32
    %c0_i32_0 = arith.constant 0 : i32
    %c0_i32_1 = arith.constant 0 : i32
    return %c0_i32, %c0_i32_0 : i32, i32
  }
  func.func @transform_7(%arg0: i32) -> (i32, i32) {
    %c0_i32 = arith.constant 0 : i32
    %c0_i32_0 = arith.constant 0 : i32
    %c0_i32_1 = arith.constant 0 : i32
    return %c0_i32, %c0_i32_0 : i32, i32
  }
  func.func @transform_8(%arg0: i32) -> (i32, i32, i32) {
    %c0_i32 = arith.constant 0 : i32
    %c0_i32_0 = arith.constant 0 : i32
    %c0_i32_1 = arith.constant 0 : i32
    return %arg0, %c0_i32, %c0_i32_0 : i32, i32, i32
  }
}

</mosaic_0001>

<llo_original>
// kernel: resnet_block_forward.1
$region0: #{resnet_block_forward.1}
  #allocation0 [shape = 'u32[]', space=smem, size = 0x4, offset = 0x4, fixed_abs, tag = 'smem constant byte address 0x4 - core index']
  #allocation1 [shape = 'u32[72,128]{1,0:T(1,128)}', space=vmem, size = 0x9000, scoped, tag = 'internal scratch']
  %s0 = inlined_call_operand.vmem [shape: f32[2,4,256], index: 0, kind: input, shape index: {}]
  %s1 = inlined_call_operand.vmem [shape: f32[9,256], index: 1, kind: input, shape index: {}]
  %s2 = inlined_call_operand.vmem [shape: bf16[9,4,4], index: 2, kind: input, shape index: {}]
  %s3 = inlined_call_operand.vmem [shape: f32[4,1], index: 3, kind: input, shape index: {}]
  %s4 = inlined_call_operand.vmem [shape: f32[4,1], index: 4, kind: input, shape index: {}]
  %s5 = inlined_call_operand.vmem [shape: bf16[9,4,4], index: 5, kind: input, shape index: {}]
  %s6 = inlined_call_operand.vmem [shape: f32[4,1], index: 6, kind: input, shape index: {}]
  %s7 = inlined_call_operand.vmem [shape: f32[4,1], index: 7, kind: input, shape index: {}]
  %s8 = inlined_call_operand.vmem [shape: f32[2,4,256], index: 8, kind: output, shape index: {}]
  %s9 = sld [smem:[#allocation0]]
  $region65: #{resnet_block_forward.1} parent=0
    _
  %s11 = ssub.s32 1, %s9
  %s12 = scalar_select 0, %s11, %s9
  loop: start=0, step=1, limit=4
  $region2: #{resnet_block_forward.1} parent=0 // loop_pre_header
    _
  $region3: #{resnet_block_forward.1} parent=0 // loop_header
    %s14 = sphi 0, %s18
    %p15 = scmp.ge.s32.totalorder %s14, 4
    %s24 = sphi 0, %s26
    %s27 = sphi 0, %s24
    %s28 = sphi 0, %s27
    %s44 = sphi 0, %s28
    %s48 = sphi 0, %s48
    %s50 = sphi 0, %s48
    %s51 = sphi 0, %s50
    %s65 = sphi 0, %s51
    %s69 = sphi 0, %s69
    %s71 = sphi 0, %s69
    %s72 = sphi 0, %s71
    %s86 = sphi 0, %s72
    %s90 = sphi 0, %s90
    %s92 = sphi 0, %s90
    %s93 = sphi 0, %s92
    %s107 = sphi 0, %s93
    %s111 = sphi 0, %s111
    %s113 = sphi 0, %s111
    %s114 = sphi 0, %s113
    %s128 = sphi 0, %s114
    %s132 = sphi 0, %s132
    %s134 = sphi 0, %s132
    %s135 = sphi 0, %s134
    %s149 = sphi 0, %s135
    %s153 = sphi 0, %s153
    %s155 = sphi 0, %s153
    %s156 = sphi 0, %s155
    %s170 = sphi 0, %s156
    %s174 = sphi 0, %s174
    %s176 = sphi 0, %s174
    %s177 = sphi 0, %s176
    %s191 = sphi 0, %s177
    %s197 = sphi 0, %s199
    %s200 = sphi 0, %s197
    %s201 = sphi 0, %s200
    %s217 = sphi 0, %s201
  $region4: #{resnet_block_forward.1} parent=0 // loop_header_branch
    %17 = sbr.rel (%p15) target = $region8
  $region5: #{resnet_block_forward.1} parent=0 // loop_body
    %s19 = ssub.s32 %s14, 1
    %s20 = ssub.s32 %s14, 2
    %s21 = sadd.s32 %s14, 1
    %s22 = ssub.s32 %s14, %s21
    %p23 = scmp.eq.s32.totalorder %s22, 0
    %s25 = sadd.s32 %s24, 1
    %s26 = scalar_select %p23, %s24, %s25
    %p29 = pneg %p23
    %p30 = scmp.eq.s32.totalorder %s14, 1
    %p31 = por %p29, %p30
    %p32 = scmp.ne.s32.totalorder %s24, %s27
    %p33 = scmp.eq.s32.totalorder %s14, 0
    %p34 = por %p32, %p33
    %p35 = scmp.ne.s32.totalorder %s24, %s27
    %p36 = scmp.eq.s32.totalorder %s19, 1
    %p37 = por %p35, %p36
    %p38 = scmp.ne.s32.totalorder %s27, %s28
    %p39 = scmp.eq.s32.totalorder %s19, 0
    %p40 = por %p38, %p39
    %p41 = scmp.ne.s32.totalorder %s27, %s28
    %p42 = scmp.eq.s32.totalorder %s20, 1
    %p43 = por %p41, %p42
    %p45 = scmp.ne.s32.totalorder %s28, %s44
    %p46 = scmp.eq.s32.totalorder %s20, 0
    %p47 = por %p45, %p46
    %s49 = sadd.s32 %s48, 1
    %p52 = scmp.eq.s32.totalorder %s14, 1
    %p53 = scmp.ne.s32.totalorder %s48, %s50
    %p54 = scmp.eq.s32.totalorder %s14, 0
    %p55 = por %p53, %p54
    %p56 = scmp.ne.s32.totalorder %s48, %s50
    %p57 = scmp.eq.s32.totalorder %s19, 1
    %p58 = por %p56, %p57
    %p59 = scmp.ne.s32.totalorder %s50, %s51
    %p60 = scmp.eq.s32.totalorder %s19, 0
    %p61 = por %p59, %p60
    %p62 = scmp.ne.s32.totalorder %s50, %s51
    %p63 = scmp.eq.s32.totalorder %s20, 1
    %p64 = por %p62, %p63
    %p66 = scmp.ne.s32.totalorder %s51, %s65
    %p67 = scmp.eq.s32.totalorder %s20, 0
    %p68 = por %p66, %p67
    %s70 = sadd.s32 %s69, 1
    %p73 = scmp.eq.s32.totalorder %s14, 1
    %p74 = scmp.ne.s32.totalorder %s69, %s71
    %p75 = scmp.eq.s32.totalorder %s14, 0
    %p76 = por %p74, %p75
    %p77 = scmp.ne.s32.totalorder %s69, %s71
    %p78 = scmp.eq.s32.totalorder %s19, 1
    %p79 = por %p77, %p78
    %p80 = scmp.ne.s32.totalorder %s71, %s72
    %p81 = scmp.eq.s32.totalorder %s19, 0
    %p82 = por %p80, %p81
    %p83 = scmp.ne.s32.totalorder %s71, %s72
    %p84 = scmp.eq.s32.totalorder %s20, 1
    %p85 = por %p83, %p84
    %p87 = scmp.ne.s32.totalorder %s72, %s86
    %p88 = scmp.eq.s32.totalorder %s20, 0
    %p89 = por %p87, %p88
    %s91 = sadd.s32 %s90, 1
    %p94 = scmp.eq.s32.totalorder %s14, 1
    %p95 = scmp.ne.s32.totalorder %s90, %s92
    %p96 = scmp.eq.s32.totalorder %s14, 0
    %p97 = por %p95, %p96
    %p98 = scmp.ne.s32.totalorder %s90, %s92
    %p99 = scmp.eq.s32.totalorder %s19, 1
    %p100 = por %p98, %p99
    %p101 = scmp.ne.s32.totalorder %s92, %s93
    %p102 = scmp.eq.s32.totalorder %s19, 0
    %p103 = por %p101, %p102
    %p104 = scmp.ne.s32.totalorder %s92, %s93
    %p105 = scmp.eq.s32.totalorder %s20, 1
    %p106 = por %p104, %p105
    %p108 = scmp.ne.s32.totalorder %s93, %s107
    %p109 = scmp.eq.s32.totalorder %s20, 0
    %p110 = por %p108, %p109
    %s112 = sadd.s32 %s111, 1
    %p115 = scmp.eq.s32.totalorder %s14, 1
    %p116 = scmp.ne.s32.totalorder %s111, %s113
    %p117 = scmp.eq.s32.totalorder %s14, 0
    %p118 = por %p116, %p117
    %p119 = scmp.ne.s32.totalorder %s111, %s113
    %p120 = scmp.eq.s32.totalorder %s19, 1
    %p121 = por %p119, %p120
    %p122 = scmp.ne.s32.totalorder %s113, %s114
    %p123 = scmp.eq.s32.totalorder %s19, 0
    %p124 = por %p122, %p123
    %p125 = scmp.ne.s32.totalorder %s113, %s114
    %p126 = scmp.eq.s32.totalorder %s20, 1
    %p127 = por %p125, %p126
    %p129 = scmp.ne.s32.totalorder %s114, %s128
    %p130 = scmp.eq.s32.totalorder %s20, 0
    %p131 = por %p129, %p130
    %s133 = sadd.s32 %s132, 1
    %p136 = scmp.eq.s32.totalorder %s14, 1
    %p137 = scmp.ne.s32.totalorder %s132, %s134
    %p138 = scmp.eq.s32.totalorder %s14, 0
    %p139 = por %p137, %p138
    %p140 = scmp.ne.s32.totalorder %s132, %s134
    %p141 = scmp.eq.s32.totalorder %s19, 1
    %p142 = por %p140, %p141
    %p143 = scmp.ne.s32.totalorder %s134, %s135
    %p144 = scmp.eq.s32.totalorder %s19, 0
    %p145 = por %p143, %p144
    %p146 = scmp.ne.s32.totalorder %s134, %s135
    %p147 = scmp.eq.s32.totalorder %s20, 1
    %p148 = por %p146, %p147
    %p150 = scmp.ne.s32.totalorder %s135, %s149
    %p151 = scmp.eq.s32.totalorder %s20, 0
    %p152 = por %p150, %p151
    %s154 = sadd.s32 %s153, 1
    %p157 = scmp.eq.s32.totalorder %s14, 1
    %p158 = scmp.ne.s32.totalorder %s153, %s155
    %p159 = scmp.eq.s32.totalorder %s14, 0
    %p160 = por %p158, %p159
    %p161 = scmp.ne.s32.totalorder %s153, %s155
    %p162 = scmp.eq.s32.totalorder %s19, 1
    %p163 = por %p161, %p162
    %p164 = scmp.ne.s32.totalorder %s155, %s156
    %p165 = scmp.eq.s32.totalorder %s19, 0
    %p166 = por %p164, %p165
    %p167 = scmp.ne.s32.totalorder %s155, %s156
    %p168 = scmp.eq.s32.totalorder %s20, 1
    %p169 = por %p167, %p168
    %p171 = scmp.ne.s32.totalorder %s156, %s170
    %p172 = scmp.eq.s32.totalorder %s20, 0
    %p173 = por %p171, %p172
    %s175 = sadd.s32 %s174, 1
    %p178 = scmp.eq.s32.totalorder %s14, 1
    %p179 = scmp.ne.s32.totalorder %s174, %s176
    %p180 = scmp.eq.s32.totalorder %s14, 0
    %p181 = por %p179, %p180
    %p182 = scmp.ne.s32.totalorder %s174, %s176
    %p183 = scmp.eq.s32.totalorder %s19, 1
    %p184 = por %p182, %p183
    %p185 = scmp.ne.s32.totalorder %s176, %s177
    %p186 = scmp.eq.s32.totalorder %s19, 0
    %p187 = por %p185, %p186
    %p188 = scmp.ne.s32.totalorder %s176, %s177
    %p189 = scmp.eq.s32.totalorder %s20, 1
    %p190 = por %p188, %p189
    %p192 = scmp.ne.s32.totalorder %s177, %s191
    %p193 = scmp.eq.s32.totalorder %s20, 0
    %p194 = por %p192, %p193
    %s195 = ssub.s32 %s14, %s21
    %p196 = scmp.eq.s32.totalorder %s195, 0
    %s198 = sadd.s32 %s197, 1
    %s199 = scalar_select %p196, %s197, %s198
    %p202 = pneg %p196
    %p203 = scmp.eq.s32.totalorder %s14, 1
    %p204 = por %p202, %p203
    %p205 = scmp.ne.s32.totalorder %s197, %s200
    %p206 = scmp.eq.s32.totalorder %s14, 0
    %p207 = por %p205, %p206
    %p208 = scmp.ne.s32.totalorder %s197, %s200
    %p209 = scmp.eq.s32.totalorder %s19, 1
    %p210 = por %p208, %p209
    %p211 = scmp.ne.s32.totalorder %s200, %s201
    %p212 = scmp.eq.s32.totalorder %s19, 0
    %p213 = por %p211, %p212
    %p214 = scmp.ne.s32.totalorder %s200, %s201
    %p215 = scmp.eq.s32.totalorder %s20, 1
    %p216 = por %p214, %p215
    %p218 = scmp.ne.s32.totalorder %s201, %s217
    %p219 = scmp.eq.s32.totalorder %s20, 0
    %p220 = por %p218, %p219
    %p221 = scmp.le.s32.totalorder 1, %s14
    %p222 = scmp.lt.s32.totalorder %s14, 3
    %p223 = pnand %p221, %p222
    %p224 = pneg %p223
    // Predicated region
    $region9: #{resnet_block_forward.1} parent=5 // pred_check
      _
    $region10: #{resnet_block_forward.1} parent=5 // pred_check_branch
      %226 = sbr.rel (%p223) target = $region12
    $region11: #{resnet_block_forward.1} parent=5 // pred_region
      %s227 = ssub.s32 %s14, 1
      // Predicated region
      $region13: #{resnet_block_forward.1} parent=11 // pred_check
        %p228 = pneg %p61
      $region14: #{resnet_block_forward.1} parent=11 // pred_check_branch
        %230 = sbr.rel (%p228) target = $region16
      $region15: #{resnet_block_forward.1} parent=11 // pred_region
        _
      $region16: #{resnet_block_forward.1} parent=11 // pred_fallthru
        _
      // Predicated region
      $region17: #{resnet_block_forward.1} parent=11 // pred_check
        %p231 = pneg %p82
      $region18: #{resnet_block_forward.1} parent=11 // pred_check_branch
        %233 = sbr.rel (%p231) target = $region20
      $region19: #{resnet_block_forward.1} parent=11 // pred_region
        _
      $region20: #{resnet_block_forward.1} parent=11 // pred_fallthru
        _
      // Predicated region
      $region21: #{resnet_block_forward.1} parent=11 // pred_check
        %p234 = pneg %p103
      $region22: #{resnet_block_forward.1} parent=11 // pred_check_branch
        %236 = sbr.rel (%p234) target = $region24
      $region23: #{resnet_block_forward.1} parent=11 // pred_region
        _
      $region24: #{resnet_block_forward.1} parent=11 // pred_fallthru
        _
      // Predicated region
      $region25: #{resnet_block_forward.1} parent=11 // pred_check
        %p237 = pneg %p124
      $region26: #{resnet_block_forward.1} parent=11 // pred_check_branch
        %239 = sbr.rel (%p237) target = $region28
      $region27: #{resnet_block_forward.1} parent=11 // pred_region
        _
      $region28: #{resnet_block_forward.1} parent=11 // pred_fallthru
        _
      // Predicated region
      $region29: #{resnet_block_forward.1} parent=11 // pred_check
        %p240 = pneg %p145
      $region30: #{resnet_block_forward.1} parent=11 // pred_check_branch
        %242 = sbr.rel (%p240) target = $region32
      $region31: #{resnet_block_forward.1} parent=11 // pred_region
        _
      $region32: #{resnet_block_forward.1} parent=11 // pred_fallthru
        _
      // Predicated region
      $region33: #{resnet_block_forward.1} parent=11 // pred_check
        %p243 = pneg %p166
      $region34: #{resnet_block_forward.1} parent=11 // pred_check_branch
        %245 = sbr.rel (%p243) target = $region36
      $region35: #{resnet_block_forward.1} parent=11 // pred_region
        _
      $region36: #{resnet_block_forward.1} parent=11 // pred_fallthru
        _
      // Predicated region
      $region37: #{resnet_block_forward.1} parent=11 // pred_check
        %p246 = pneg %p187
      $region38: #{resnet_block_forward.1} parent=11 // pred_check_branch
        %248 = sbr.rel (%p246) target = $region40
      $region39: #{resnet_block_forward.1} parent=11 // pred_region
        _
      $region40: #{resnet_block_forward.1} parent=11 // pred_fallthru
        _
    $region12: #{resnet_block_forward.1} parent=5 // pred_fallthru
      _
    %p249 = scmp.lt.s32.totalorder %s14, 2
    // Predicated region
    $region41: #{resnet_block_forward.1} parent=5 // pred_check
      %p250 = pneg %p249
    $region42: #{resnet_block_forward.1} parent=5 // pred_check_branch
      %252 = sbr.rel (%p250) target = $region44
    $region43: #{resnet_block_forward.1} parent=5 // pred_region
      // Predicated region
      $region45: #{resnet_block_forward.1} parent=43 // pred_check
        %p253 = pneg %p34
      $region46: #{resnet_block_forward.1} parent=43 // pred_check_branch
        %255 = sbr.rel (%p253) target = $region48
      $region47: #{resnet_block_forward.1} parent=43 // pred_region
        %p256 = scmp.lt.s32.totalorder %s14, 1
        %s257 = scalar_select %p256, %s14, 1
        %s258 = smul.addr %s257, 2
        %s259 = smul.addr %s258, 4
        %s260 = scalar_lea.vmem %s0, %s259
      $region48: #{resnet_block_forward.1} parent=43 // pred_fallthru
        _
    $region44: #{resnet_block_forward.1} parent=5 // pred_fallthru
      _
    %p261 = scmp.le.s32.totalorder 1, %s14
    %p262 = scmp.lt.s32.totalorder %s14, 3
    %p263 = pnand %p261, %p262
    %p264 = pneg %p263
    // Predicated region
    $region49: #{resnet_block_forward.1} parent=5 // pred_check
      _
    $region50: #{resnet_block_forward.1} parent=5 // pred_check_branch
      %266 = sbr.rel (%p263) target = $region52
    $region51: #{resnet_block_forward.1} parent=5 // pred_region
      %s267 = ssub.s32 %s14, 1
      %p268 = scmp.lt.s32.totalorder %s19, 1
      %s269 = scalar_select %p268, %s19, 1
      %s270 = smul.addr %s269, 2
      %s271 = smul.addr %s270, 4
      %s272 = scalar_lea.vmem %s0, %s271
      %p273 = pneg %p40
      %p274 = pneg %p37
      %p275 = pneg %p61
      %p276 = pneg %p58
      %p277 = pneg %p82
      %p278 = pneg %p79
      %p279 = pneg %p103
      %p280 = pneg %p100
      %p281 = pneg %p124
      %p282 = pneg %p121
      %p283 = pneg %p145
      %p284 = pneg %p142
      %p285 = pneg %p166
      %p286 = pneg %p163
      %p287 = pneg %p187
      %p288 = pneg %p184
      %p289 = pneg %p213
      %p290 = pneg %p210
      %p291 = scmp.lt.s32.totalorder %s19, 1
      %s292 = scalar_select %p291, %s19, 1
      %s293 = smul.addr %s292, 2
      %s294 = smul.addr %s293, 4
      %s295 = scalar_lea.vmem %s8, %s294
      %p296 = scmp.lt.s32.totalorder %s19, 1
      %s297 = scalar_select %p296, %s19, 1
      %s298 = smul.addr %s297, 2
      %s299 = smul.addr %s298, 4
      %s300 = scalar_lea.vmem %s0, %s299
      %p301 = scmp.lt.s32.totalorder %s19, 1
      %s302 = scalar_select %p301, %s19, 1
      %s303 = smul.addr %s302, 2
      %s304 = smul.addr %s303, 4
      %s305 = scalar_lea.vmem %s8, %s304
      %v307 = vld [vmem:[%s300] sm:$0xff]
      %309 = vst [vmem:[#allocation1] ss:$2 sm:$0xff] %v307
      %v310 = vld.sshfl [vmem:[#allocation1] sm:$0xff pattern:$0x75316420]
      %v311 = vld.sshfl [vmem:[#allocation1 + $0x8] sm:$0xff pattern:$0x75316420]
      %314 = vrot.lane.b32.xlu0 %v310, 17
      %v315 = vpop.permute.xlu0 %314
      %316 = vrot.lane.b32.xlu0 %v311, 17
      %v317 = vpop.permute.xlu0 %316
      %v318 = vlaneseq
      %v319 = vand.u32 %v318, 127
      %vm320 = vcmp.lt.s32.totalorder %v319, 17
      %v321 = vsel %vm320, %v315, %v317
      %v322 = vsel %vm320, %v317, %v315
      %v323 = vld [vmem:[%s1] ss:$8 sm:$0x3]
      %v325 = vperm.slane %v323, 0
      %v326 = vperm.slane %v323, 1
      %v329 = vmul.f32 %v322, %v325
      %v330 = vmul.f32 %v321, %v326
      %v331 = vpack.c.bf16 %v329, %v329
      %v332 = vpack.c.bf16 %v330, %v330
      %v333 = vld [vmem:[%s2] sm:$0x3]
      %334 = vst [vmem:[#allocation1] ss:$2 sm:$0xff] %v307
      %v335 = vld.sshfl [vmem:[#allocation1] sm:$0xff pattern:$0x75316420]
      %v336 = vld.sshfl [vmem:[#allocation1 + $0x8] sm:$0xff pattern:$0x75316420]
      %339 = vrot.lane.b32.xlu0 %v335, 16
      %v340 = vpop.permute.xlu0 %339
      %341 = vrot.lane.b32.xlu0 %v336, 16
      %v342 = vpop.permute.xlu0 %341
      %vm343 = vcmp.lt.s32.totalorder %v319, 16
      %v344 = vsel %vm343, %v340, %v342
      %v345 = vsel %vm343, %v342, %v340
      %s346 = scalar_lea.vmem %s1, 1
      %v347 = vld [vmem:[%s346] ss:$8 sm:$0x3]
      %v349 = vperm.slane %v347, 0
      %v350 = vperm.slane %v347, 1
      %v353 = vmul.f32 %v345, %v349
      %v354 = vmul.f32 %v344, %v350
      %v355 = vpack.c.bf16 %v353, %v353
      %v356 = vpack.c.bf16 %v354, %v354
      %s357 = scalar_lea.vmem %s2, 2
      %v358 = vld [vmem:[%s357] sm:$0x3]
      %vm359 = vcmask 31744
      %v361 = vsel %vm359, %v358, 0
      %vm363 = vcmask 1041408
      %v365 = vsel %vm363, %v355, 0
      %v368 = vsel %vm363, %v356, 0
      %370 = vmatpush.bf16.msra.mxu0 0
      %371 = vmatpush.bf16.msra.mxu0 0
      %372 = vmatpush.bf16.msra.mxu0 0
      %373 = vmatpush.bf16.msra.mxu0 0
      %374 = vmatpush.bf16.msra.mxu0 0
      %375 = vmatpush.bf16.msra.mxu0 0
      %376 = vmatpush.bf16.msra.mxu0 0
      %377 = vmatpush.bf16.msra.mxu0 %v365
      %378 = vmatmul.bf16.gmra.mxu0 %v361
      %v379 = vpop.f32.mrf.mxu0
      %v380 = vadd.f32 0.0, %v379
      %v381 = vpop.f32.mrf.mxu0
      %382 = vdwg.mxu0
      %383 = vmatpush.bf16.msra.mxu0 0
      %384 = vmatpush.bf16.msra.mxu0 0
      %385 = vmatpush.bf16.msra.mxu0 0
      %386 = vmatpush.bf16.msra.mxu0 0
      %387 = vmatpush.bf16.msra.mxu0 0
      %388 = vmatpush.bf16.msra.mxu0 0
      %389 = vmatpush.bf16.msra.mxu0 0
      %390 = vmatpush.bf16.msra.mxu0 %v368
      %391 = vmatmul.bf16.gmra.mxu0 %v361
      %v392 = vpop.f32.mrf.mxu0
      %v393 = vadd.f32 0.0, %v392
      %v394 = vpop.f32.mrf.mxu0
      %395 = vdwg.mxu0
      %v397 = vsel %vm359, %v333, 0
      %v400 = vsel %vm363, %v331, 0
      %v403 = vsel %vm363, %v332, 0
      %405 = vmatpush.bf16.msra.mxu0 0
      %406 = vmatpush.bf16.msra.mxu0 0
      %407 = vmatpush.bf16.msra.mxu0 0
      %408 = vmatpush.bf16.msra.mxu0 0
      %409 = vmatpush.bf16.msra.mxu0 0
      %410 = vmatpush.bf16.msra.mxu0 0
      %411 = vmatpush.bf16.msra.mxu0 0
      %412 = vmatpush.bf16.msra.mxu0 %v400
      %413 = vmatmul.bf16.gmra.mxu0 %v397
      %v414 = vpop.f32.mrf.mxu0
      %v415 = vadd.f32 %v380, %v414
      %v416 = vpop.f32.mrf.mxu0
      %417 = vdwg.mxu0
      %418 = vmatpush.bf16.msra.mxu0 0
      %419 = vmatpush.bf16.msra.mxu0 0
      %420 = vmatpush.bf16.msra.mxu0 0
      %421 = vmatpush.bf16.msra.mxu0 0
      %422 = vmatpush.bf16.msra.mxu0 0
      %423 = vmatpush.bf16.msra.mxu0 0
      %424 = vmatpush.bf16.msra.mxu0 0
      %425 = vmatpush.bf16.msra.mxu0 %v403
      %426 = vmatmul.bf16.gmra.mxu0 %v397
      %v427 = vpop.f32.mrf.mxu0
      %v428 = vadd.f32 %v393, %v427
      %v429 = vpop.f32.mrf.mxu0
      %430 = vdwg.mxu0
      %431 = vst [vmem:[#allocation1] ss:$2 sm:$0xff] %v307
      %v432 = vld.sshfl [vmem:[#allocation1] sm:$0xff pattern:$0x75316420]
      %v433 = vld.sshfl [vmem:[#allocation1 + $0x8] sm:$0xff pattern:$0x75316420]
      %436 = vrot.lane.b32.xlu0 %v432, 15
      %v437 = vpop.permute.xlu0 %436
      %438 = vrot.lane.b32.xlu0 %v433, 15
      %v439 = vpop.permute.xlu0 %438
      %vm440 = vcmp.lt.s32.totalorder %v319, 15
      %v441 = vsel %vm440, %v437, %v439
      %v442 = vsel %vm440, %v439, %v437
      %s443 = scalar_lea.vmem %s1, 2
      %v444 = vld [vmem:[%s443] ss:$8 sm:$0x3]
      %v446 = vperm.slane %v444, 0
      %v447 = vperm.slane %v444, 1
      %v450 = vmul.f32 %v442, %v446
      %v451 = vmul.f32 %v441, %v447
      %v452 = vpack.c.bf16 %v450, %v450
      %v453 = vpack.c.bf16 %v451, %v451
      %s454 = scalar_lea.vmem %s2, 4
      %v455 = vld [vmem:[%s454] sm:$0x3]
      %v457 = vsel %vm359, %v455, 0
      %v460 = vsel %vm363, %v452, 0
      %v463 = vsel %vm363, %v453, 0
      %465 = vmatpush.bf16.msra.mxu0 0
      %466 = vmatpush.bf16.msra.mxu0 0
      %467 = vmatpush.bf16.msra.mxu0 0
      %468 = vmatpush.bf16.msra.mxu0 0
      %469 = vmatpush.bf16.msra.mxu0 0
      %470 = vmatpush.bf16.msra.mxu0 0
      %471 = vmatpush.bf16.msra.mxu0 0
      %472 = vmatpush.bf16.msra.mxu0 %v460
      %473 = vmatmul.bf16.gmra.mxu0 %v457
      %v474 = vpop.f32.mrf.mxu0
      %v475 = vadd.f32 0.0, %v474
      %v476 = vpop.f32.mrf.mxu0
      %477 = vdwg.mxu0
      %478 = vmatpush.bf16.msra.mxu0 0
      %479 = vmatpush.bf16.msra.mxu0 0
      %480 = vmatpush.bf16.msra.mxu0 0
      %481 = vmatpush.bf16.msra.mxu0 0
      %482 = vmatpush.bf16.msra.mxu0 0
      %483 = vmatpush.bf16.msra.mxu0 0
      %484 = vmatpush.bf16.msra.mxu0 0
      %485 = vmatpush.bf16.msra.mxu0 %v463
      %486 = vmatmul.bf16.gmra.mxu0 %v457
      %v487 = vpop.f32.mrf.mxu0
      %v488 = vadd.f32 0.0, %v487
      %v489 = vpop.f32.mrf.mxu0
      %490 = vdwg.mxu0
      %v491 = vadd.f32 %v415, %v475
      %v492 = vadd.f32 %v428, %v488
      %493 = vst [vmem:[#allocation1] ss:$2 sm:$0xff] %v307
      %v494 = vld.sshfl [vmem:[#allocation1] sm:$0xff pattern:$0x75316420]
      %v495 = vld.sshfl [vmem:[#allocation1 + $0x8] sm:$0xff pattern:$0x75316420]
      %498 = vrot.lane.b32.xlu0 %v494, 1
      %v499 = vpop.permute.xlu0 %498
      %500 = vrot.lane.b32.xlu0 %v495, 1
      %v501 = vpop.permute.xlu0 %500
      %vm502 = vcmp.lt.s32.totalorder %v319, 1
      %v503 = vsel %vm502, %v499, %v501
      %v504 = vsel %vm502, %v501, %v499
      %s505 = scalar_lea.vmem %s1, 3
      %v506 = vld [vmem:[%s505] ss:$8 sm:$0x3]
      %v508 = vperm.slane %v506, 0
      %v509 = vperm.slane %v506, 1
      %v512 = vmul.f32 %v504, %v508
      %v513 = vmul.f32 %v503, %v509
      %v514 = vpack.c.bf16 %v512, %v512
      %v515 = vpack.c.bf16 %v513, %v513
      %s516 = scalar_lea.vmem %s2, 6
      %v517 = vld [vmem:[%s516] sm:$0x3]
      %v519 = vsel %vm359, %v517, 0
      %v522 = vsel %vm363, %v514, 0
      %v525 = vsel %vm363, %v515, 0
      %527 = vmatpush.bf16.msra.mxu0 0
      %528 = vmatpush.bf16.msra.mxu0 0
      %529 = vmatpush.bf16.msra.mxu0 0
      %530 = vmatpush.bf16.msra.mxu0 0
      %531 = vmatpush.bf16.msra.mxu0 0
      %532 = vmatpush.bf16.msra.mxu0 0
      %533 = vmatpush.bf16.msra.mxu0 0
      %534 = vmatpush.bf16.msra.mxu0 %v522
      %535 = vmatmul.bf16.gmra.mxu0 %v519
      %v536 = vpop.f32.mrf.mxu0
      %v537 = vadd.f32 0.0, %v536
      %v538 = vpop.f32.mrf.mxu0
      %539 = vdwg.mxu0
      %540 = vmatpush.bf16.msra.mxu0 0
      %541 = vmatpush.bf16.msra.mxu0 0
      %542 = vmatpush.bf16.msra.mxu0 0
      %543 = vmatpush.bf16.msra.mxu0 0
      %544 = vmatpush.bf16.msra.mxu0 0
      %545 = vmatpush.bf16.msra.mxu0 0
      %546 = vmatpush.bf16.msra.mxu0 0
      %547 = vmatpush.bf16.msra.mxu0 %v525
      %548 = vmatmul.bf16.gmra.mxu0 %v519
      %v549 = vpop.f32.mrf.mxu0
      %v550 = vadd.f32 0.0, %v549
      %v551 = vpop.f32.mrf.mxu0
      %552 = vdwg.mxu0
      %v553 = vadd.f32 %v491, %v537
      %v554 = vadd.f32 %v492, %v550
      %s555 = scalar_lea.vmem %s1, 4
      %v556 = vld [vmem:[%s555] ss:$8 sm:$0x3]
      %v558 = vperm.slane %v556, 0
      %v559 = vperm.slane %v556, 1
      %v562 = vrot.slane %v559, 4
      %vm563 = vcmask 1043456
      %v564 = vsel %vm563, %v558, %v562
      %v566 = vmul.f32 %v307, %v564
      %568 = vst [vmem:[#allocation1] ss:$2 sm:$0xff] %v566
      %v569 = vld.sshfl [vmem:[#allocation1] sm:$0xff pattern:$0x75316420]
      %v570 = vld.sshfl [vmem:[#allocation1 + $0x8] sm:$0xff pattern:$0x75316420]
      %v573 = vpack.c.bf16 %v569, %v569
      %v574 = vpack.c.bf16 %v570, %v570
      %s575 = scalar_lea.vmem %s2, 8
      %v576 = vld [vmem:[%s575] sm:$0x3]
      %v578 = vsel %vm359, %v576, 0
      %v581 = vsel %vm363, %v573, 0
      %v584 = vsel %vm363, %v574, 0
      %586 = vmatpush.bf16.msra.mxu0 0
      %587 = vmatpush.bf16.msra.mxu0 0
      %588 = vmatpush.bf16.msra.mxu0 0
      %589 = vmatpush.bf16.msra.mxu0 0
      %590 = vmatpush.bf16.msra.mxu0 0
      %591 = vmatpush.bf16.msra.mxu0 0
      %592 = vmatpush.bf16.msra.mxu0 0
      %593 = vmatpush.bf16.msra.mxu0 %v581
      %594 = vmatmul.bf16.gmra.mxu0 %v578
      %v595 = vpop.f32.mrf.mxu0
      %v596 = vadd.f32 0.0, %v595
      %v597 = vpop.f32.mrf.mxu0
      %598 = vdwg.mxu0
      %599 = vmatpush.bf16.msra.mxu0 0
      %600 = vmatpush.bf16.msra.mxu0 0
      %601 = vmatpush.bf16.msra.mxu0 0
      %602 = vmatpush.bf16.msra.mxu0 0
      %603 = vmatpush.bf16.msra.mxu0 0
      %604 = vmatpush.bf16.msra.mxu0 0
      %605 = vmatpush.bf16.msra.mxu0 0
      %606 = vmatpush.bf16.msra.mxu0 %v584
      %607 = vmatmul.bf16.gmra.mxu0 %v578
      %v608 = vpop.f32.mrf.mxu0
      %v609 = vadd.f32 0.0, %v608
      %v610 = vpop.f32.mrf.mxu0
      %611 = vdwg.mxu0
      %v612 = vadd.f32 %v553, %v596
      %v613 = vadd.f32 %v554, %v609
      %614 = vst [vmem:[#allocation1] ss:$2 sm:$0xff] %v307
      %v615 = vld.sshfl [vmem:[#allocation1] sm:$0xff pattern:$0x75316420]
      %v616 = vld.sshfl [vmem:[#allocation1 + $0x8] sm:$0xff pattern:$0x75316420]
      %619 = vrot.lane.b32.xlu0 %v615, 127
      %v620 = vpop.permute.xlu0 %619
      %621 = vrot.lane.b32.xlu0 %v616, 127
      %v622 = vpop.permute.xlu0 %621
      %vm623 = vcmp.lt.s32.totalorder %v319, 127
      %v624 = vsel %vm623, %v620, %v622
      %v625 = vsel %vm623, %v622, %v620
      %s626 = scalar_lea.vmem %s1, 5
      %v627 = vld [vmem:[%s626] ss:$8 sm:$0x3]
      %v629 = vperm.slane %v627, 0
      %v630 = vperm.slane %v627, 1
      %v633 = vmul.f32 %v624, %v629
      %v634 = vmul.f32 %v625, %v630
      %v635 = vpack.c.bf16 %v633, %v633
      %v636 = vpack.c.bf16 %v634, %v634
      %s637 = scalar_lea.vmem %s2, 10
      %v638 = vld [vmem:[%s637] sm:$0x3]
      %v640 = vsel %vm359, %v638, 0
      %v643 = vsel %vm363, %v635, 0
      %v646 = vsel %vm363, %v636, 0
      %648 = vmatpush.bf16.msra.mxu0 0
      %649 = vmatpush.bf16.msra.mxu0 0
      %650 = vmatpush.bf16.msra.mxu0 0
      %651 = vmatpush.bf16.msra.mxu0 0
      %652 = vmatpush.bf16.msra.mxu0 0
      %653 = vmatpush.bf16.msra.mxu0 0
      %654 = vmatpush.bf16.msra.mxu0 0
      %655 = vmatpush.bf16.msra.mxu0 %v643
      %656 = vmatmul.bf16.gmra.mxu0 %v640
      %v657 = vpop.f32.mrf.mxu0
      %v658 = vadd.f32 0.0, %v657
      %v659 = vpop.f32.mrf.mxu0
      %660 = vdwg.mxu0
      %661 = vmatpush.bf16.msra.mxu0 0
      %662 = vmatpush.bf16.msra.mxu0 0
      %663 = vmatpush.bf16.msra.mxu0 0
      %664 = vmatpush.bf16.msra.mxu0 0
      %665 = vmatpush.bf16.msra.mxu0 0
      %666 = vmatpush.bf16.msra.mxu0 0
      %667 = vmatpush.bf16.msra.mxu0 0
      %668 = vmatpush.bf16.msra.mxu0 %v646
      %669 = vmatmul.bf16.gmra.mxu0 %v640
      %v670 = vpop.f32.mrf.mxu0
      %v671 = vadd.f32 0.0, %v670
      %v672 = vpop.f32.mrf.mxu0
      %673 = vdwg.mxu0
      %v674 = vadd.f32 %v612, %v658
      %v675 = vadd.f32 %v613, %v671
      %676 = vst [vmem:[#allocation1] ss:$2 sm:$0xff] %v307
      %v677 = vld.sshfl [vmem:[#allocation1] sm:$0xff pattern:$0x75316420]
      %v678 = vld.sshfl [vmem:[#allocation1 + $0x8] sm:$0xff pattern:$0x75316420]
      %681 = vrot.lane.b32.xlu0 %v677, 113
      %v682 = vpop.permute.xlu0 %681
      %683 = vrot.lane.b32.xlu0 %v678, 113
      %v684 = vpop.permute.xlu0 %683
      %vm685 = vcmp.lt.s32.totalorder %v319, 113
      %v686 = vsel %vm685, %v682, %v684
      %v687 = vsel %vm685, %v684, %v682
      %s688 = scalar_lea.vmem %s1, 6
      %v689 = vld [vmem:[%s688] ss:$8 sm:$0x3]
      %v691 = vperm.slane %v689, 0
      %v692 = vperm.slane %v689, 1
      %v695 = vmul.f32 %v686, %v691
      %v696 = vmul.f32 %v687, %v692
      %v697 = vpack.c.bf16 %v695, %v695
      %v698 = vpack.c.bf16 %v696, %v696
      %s699 = scalar_lea.vmem %s2, 12
      %v700 = vld [vmem:[%s699] sm:$0x3]
      %v702 = vsel %vm359, %v700, 0
      %v705 = vsel %vm363, %v697, 0
      %v708 = vsel %vm363, %v698, 0
      %710 = vmatpush.bf16.msra.mxu0 0
      %711 = vmatpush.bf16.msra.mxu0 0
      %712 = vmatpush.bf16.msra.mxu0 0
      %713 = vmatpush.bf16.msra.mxu0 0
      %714 = vmatpush.bf16.msra.mxu0 0
      %715 = vmatpush.bf16.msra.mxu0 0
      %716 = vmatpush.bf16.msra.mxu0 0
      %717 = vmatpush.bf16.msra.mxu0 %v705
      %718 = vmatmul.bf16.gmra.mxu0 %v702
      %v719 = vpop.f32.mrf.mxu0
      %v720 = vadd.f32 0.0, %v719
      %v721 = vpop.f32.mrf.mxu0
      %722 = vdwg.mxu0
      %723 = vmatpush.bf16.msra.mxu0 0
      %724 = vmatpush.bf16.msra.mxu0 0
      %725 = vmatpush.bf16.msra.mxu0 0
      %726 = vmatpush.bf16.msra.mxu0 0
      %727 = vmatpush.bf16.msra.mxu0 0
      %728 = vmatpush.bf16.msra.mxu0 0
      %729 = vmatpush.bf16.msra.mxu0 0
      %730 = vmatpush.bf16.msra.mxu0 %v708
      %731 = vmatmul.bf16.gmra.mxu0 %v702
      %v732 = vpop.f32.mrf.mxu0
      %v733 = vadd.f32 0.0, %v732
      %v734 = vpop.f32.mrf.mxu0
      %735 = vdwg.mxu0
      %v736 = vadd.f32 %v674, %v720
      %v737 = vadd.f32 %v675, %v733
      %738 = vst [vmem:[#allocation1] ss:$2 sm:$0xff] %v307
      %v739 = vld.sshfl [vmem:[#allocation1] sm:$0xff pattern:$0x75316420]
      %v740 = vld.sshfl [vmem:[#allocation1 + $0x8] sm:$0xff pattern:$0x75316420]
      %743 = vrot.lane.b32.xlu0 %v739, 112
      %v744 = vpop.permute.xlu0 %743
      %745 = vrot.lane.b32.xlu0 %v740, 112
      %v746 = vpop.permute.xlu0 %745
      %vm747 = vcmp.lt.s32.totalorder %v319, 112
      %v748 = vsel %vm747, %v744, %v746
      %v749 = vsel %vm747, %v746, %v744
      %s750 = scalar_lea.vmem %s1, 7
      %v751 = vld [vmem:[%s750] ss:$8 sm:$0x3]
      %v753 = vperm.slane %v751, 0
      %v754 = vperm.slane %v751, 1
      %v757 = vmul.f32 %v748, %v753
      %v758 = vmul.f32 %v749, %v754
      %v759 = vpack.c.bf16 %v757, %v757
      %v760 = vpack.c.bf16 %v758, %v758
      %s761 = scalar_lea.vmem %s2, 14
      %v762 = vld [vmem:[%s761] sm:$0x3]
      %v764 = vsel %vm359, %v762, 0
      %v767 = vsel %vm363, %v759, 0
      %v770 = vsel %vm363, %v760, 0
      %772 = vmatpush.bf16.msra.mxu0 0
      %773 = vmatpush.bf16.msra.mxu0 0
      %774 = vmatpush.bf16.msra.mxu0 0
      %775 = vmatpush.bf16.msra.mxu0 0
      %776 = vmatpush.bf16.msra.mxu0 0
      %777 = vmatpush.bf16.msra.mxu0 0
      %778 = vmatpush.bf16.msra.mxu0 0
      %779 = vmatpush.bf16.msra.mxu0 %v767
      %780 = vmatmul.bf16.gmra.mxu0 %v764
      %v781 = vpop.f32.mrf.mxu0
      %v782 = vadd.f32 0.0, %v781
      %v783 = vpop.f32.mrf.mxu0
      %784 = vdwg.mxu0
      %785 = vmatpush.bf16.msra.mxu0 0
      %786 = vmatpush.bf16.msra.mxu0 0
      %787 = vmatpush.bf16.msra.mxu0 0
      %788 = vmatpush.bf16.msra.mxu0 0
      %789 = vmatpush.bf16.msra.mxu0 0
      %790 = vmatpush.bf16.msra.mxu0 0
      %791 = vmatpush.bf16.msra.mxu0 0
      %792 = vmatpush.bf16.msra.mxu0 %v770
      %793 = vmatmul.bf16.gmra.mxu0 %v764
      %v794 = vpop.f32.mrf.mxu0
      %v795 = vadd.f32 0.0, %v794
      %v796 = vpop.f32.mrf.mxu0
      %797 = vdwg.mxu0
      %v798 = vadd.f32 %v736, %v782
      %v799 = vadd.f32 %v737, %v795
      %800 = vst [vmem:[#allocation1] ss:$2 sm:$0xff] %v307
      %v801 = vld.sshfl [vmem:[#allocation1] sm:$0xff pattern:$0x75316420]
      %v802 = vld.sshfl [vmem:[#allocation1 + $0x8] sm:$0xff pattern:$0x75316420]
      %805 = vrot.lane.b32.xlu0 %v801, 111
      %v806 = vpop.permute.xlu0 %805
      %807 = vrot.lane.b32.xlu0 %v802, 111
      %v808 = vpop.permute.xlu0 %807
      %vm809 = vcmp.lt.s32.totalorder %v319, 111
      %v810 = vsel %vm809, %v806, %v808
      %v811 = vsel %vm809, %v808, %v806
      %s812 = scalar_lea.vmem %s1, 16
      %v813 = vld [vmem:[%s812] ss:$8 sm:$0x3]
      %v815 = vperm.slane %v813, 0
      %v816 = vperm.slane %v813, 1
      %v819 = vmul.f32 %v810, %v815
      %v820 = vmul.f32 %v811, %v816
      %v821 = vpack.c.bf16 %v819, %v819
      %v822 = vpack.c.bf16 %v820, %v820
      %s823 = scalar_lea.vmem %s2, 16
      %v824 = vld [vmem:[%s823] sm:$0x3]
      %v826 = vsel %vm359, %v824, 0
      %v829 = vsel %vm363, %v821, 0
      %v832 = vsel %vm363, %v822, 0
      %834 = vmatpush.bf16.msra.mxu0 0
      %835 = vmatpush.bf16.msra.mxu0 0
      %836 = vmatpush.bf16.msra.mxu0 0
      %837 = vmatpush.bf16.msra.mxu0 0
      %838 = vmatpush.bf16.msra.mxu0 0
      %839 = vmatpush.bf16.msra.mxu0 0
      %840 = vmatpush.bf16.msra.mxu0 0
      %841 = vmatpush.bf16.msra.mxu0 %v829
      %842 = vmatmul.bf16.gmra.mxu0 %v826
      %v843 = vpop.f32.mrf.mxu0
      %v844 = vadd.f32 0.0, %v843
      %v845 = vpop.f32.mrf.mxu0
      %846 = vdwg.mxu0
      %847 = vmatpush.bf16.msra.mxu0 0
      %848 = vmatpush.bf16.msra.mxu0 0
      %849 = vmatpush.bf16.msra.mxu0 0
      %850 = vmatpush.bf16.msra.mxu0 0
      %851 = vmatpush.bf16.msra.mxu0 0
      %852 = vmatpush.bf16.msra.mxu0 0
      %853 = vmatpush.bf16.msra.mxu0 0
      %854 = vmatpush.bf16.msra.mxu0 %v832
      %855 = vmatmul.bf16.gmra.mxu0 %v826
      %v856 = vpop.f32.mrf.mxu0
      %v857 = vadd.f32 0.0, %v856
      %v858 = vpop.f32.mrf.mxu0
      %859 = vdwg.mxu0
      %v860 = vadd.f32 %v798, %v844
      %v861 = vadd.f32 %v799, %v857
      %v862 = vsel %vm563, %v860, 0.0
      %v863 = vsel %vm563, %v861, 0.0
      %v864 = vadd.f32 %v862, %v863
      %865 = vadd.xlane.f32.xlu0 %v864
      %v866 = vpop.xlane.xlu0 %865
      %v867 = vsel %vm563, %v866, 0.0
      %v868 = vrot.slane %v867, 4
      %v869 = vadd.f32 %v867, %v868
      %v870 = vrot.slane %v869, 2
      %v871 = vadd.f32 %v869, %v870
      %v872 = vrot.slane %v871, 1
      %v873 = vadd.f32 %v871, %v872
      %v874 = vrcp.pop 1024.0
      %v875 = vmul.f32 1024.0, %v874
      %v876 = vsub.f32 1.0, %v875
      %v877 = vmul.f32 %v874, %v876
      %v878 = vadd.f32 %v874, %v877
      %vm879 = vweird.f32 %v874
      %v880 = vsel %vm879, %v874, %v878
      %v881 = vmul.f32 %v873, %v880
      %v882 = vsub.f32 %v860, %v881
      %v883 = vsub.f32 %v861, %v881
      %v884 = vmul.f32 %v882, %v882
      %v885 = vmul.f32 %v883, %v883
      %v886 = vsel %vm563, %v884, 0.0
      %v887 = vsel %vm563, %v885, 0.0
      %v888 = vadd.f32 %v886, %v887
      %889 = vadd.xlane.f32.xlu0 %v888
      %v890 = vpop.xlane.xlu0 %889
      %v891 = vsel %vm563, %v890, 0.0
      %v892 = vrot.slane %v891, 4
      %v893 = vadd.f32 %v891, %v892
      %v894 = vrot.slane %v893, 2
      %v895 = vadd.f32 %v893, %v894
      %v896 = vrot.slane %v895, 1
      %v897 = vadd.f32 %v895, %v896
      %v898 = vmul.f32 %v897, %v880
      %v899 = vadd.f32 %v898, 1e-05
      %v900 = vrsqrt.pop %v899
      %v901 = vmul.f32 %v900, %v899
      %v902 = vmul.f32 %v901, %v900
      %v903 = vmul.f32 0.5, %v902
      %v904 = vsub.f32 1.5, %v903
      %v905 = vmul.f32 %v900, %v904
      %vm906 = vweird.f32 %v899
      %vm907 = vweird.f32 %v900
      %vm908 = vmor %vm906, %vm907
      %v909 = vsel %vm908, %v900, %v905
      %v910 = vmul.f32 %v882, %v909
      %v911 = vmul.f32 %v883, %v909
      %v912 = vld [vmem:[%s3] sm:$0xf]
      %914 = vset.pattern.permute.xlu0 0
      %915 = vperm.xlu0 %914, %v912
      %v916 = vpop.permute.xlu0 %915
      %v918 = vmul.f32 %v910, %v916
      %v919 = vmul.f32 %v911, %v916
      %v920 = vld [vmem:[%s4] sm:$0xf]
      %922 = vset.pattern.permute.xlu0 0
      %923 = vperm.xlu0 %922, %v920
      %v924 = vpop.permute.xlu0 %923
      %v926 = vadd.f32 %v918, %v924
      %v927 = vadd.f32 %v919, %v924
      %v928 = vxor.u32 %v926, 2147483648
      %v929 = vxor.u32 %v927, 2147483648
      %v930 = vmul.f32 %v928, 1.442695
      %v931 = vpow.pop %v930
      %v932 = vmul.f32 %v929, 1.442695
      %v933 = vpow.pop %v932
      %v934 = vadd.f32 %v931, 1.0
      %v935 = vadd.f32 %v933, 1.0
      %v936 = vrcp.pop %v934
      %v937 = vmul.f32 %v934, %v936
      %v938 = vsub.f32 1.0, %v937
      %v939 = vmul.f32 %v936, %v938
      %v940 = vadd.f32 %v936, %v939
      %vm941 = vweird.f32 %v934
      %vm942 = vweird.f32 %v936
      %vm943 = vmor %vm941, %vm942
      %v944 = vsel %vm943, %v936, %v940
      %v945 = vand.u32 2147483647, %v934
      %vm946 = vcmp.eq.f32.partialorder %v945, 8.507059e+37
      %v947 = vand.u32 %v934, 2147483648
      %v948 = vor.u32 1.1754944e-38, %v947
      %v949 = vsel %vm946, %v948, %v944
      %v950 = vmul.f32 1.0, %v949
      %v951 = vrcp.pop %v935
      %v952 = vmul.f32 %v935, %v951
      %v953 = vsub.f32 1.0, %v952
      %v954 = vmul.f32 %v951, %v953
      %v955 = vadd.f32 %v951, %v954
      %vm956 = vweird.f32 %v935
      %vm957 = vweird.f32 %v951
      %vm958 = vmor %vm956, %vm957
      %v959 = vsel %vm958, %v951, %v955
      %v960 = vand.u32 2147483647, %v935
      %vm961 = vcmp.eq.f32.partialorder %v960, 8.507059e+37
      %v962 = vand.u32 %v935, 2147483648
      %v963 = vor.u32 1.1754944e-38, %v962
      %v964 = vsel %vm961, %v963, %v959
      %v965 = vmul.f32 1.0, %v964
      %v966 = vmul.f32 %v926, %v950
      %v967 = vmul.f32 %v927, %v965
      %968 = vrot.lane.b32.xlu0 %v966, 17
      %v969 = vpop.permute.xlu0 %968
      %970 = vrot.lane.b32.xlu0 %v967, 17
      %v971 = vpop.permute.xlu0 %970
      %v972 = vsel %vm320, %v969, %v971
      %v973 = vsel %vm320, %v971, %v969
      %v974 = vmul.f32 %v973, %v325
      %v975 = vmul.f32 %v972, %v326
      %v976 = vpack.c.bf16 %v974, %v974
      %v977 = vpack.c.bf16 %v975, %v975
      %v978 = vld [vmem:[%s5] sm:$0x3]
      %979 = vrot.lane.b32.xlu0 %v966, 16
      %v980 = vpop.permute.xlu0 %979
      %981 = vrot.lane.b32.xlu0 %v967, 16
      %v982 = vpop.permute.xlu0 %981
      %v983 = vsel %vm343, %v980, %v982
      %v984 = vsel %vm343, %v982, %v980
      %v985 = vmul.f32 %v984, %v349
      %v986 = vmul.f32 %v983, %v350
      %v987 = vpack.c.bf16 %v985, %v985
      %v988 = vpack.c.bf16 %v986, %v986
      %s989 = scalar_lea.vmem %s5, 2
      %v990 = vld [vmem:[%s989] sm:$0x3]
      %v992 = vsel %vm359, %v990, 0
      %v995 = vsel %vm363, %v987, 0
      %v998 = vsel %vm363, %v988, 0
      %1000 = vmatpush.bf16.msra.mxu0 0
      %1001 = vmatpush.bf16.msra.mxu0 0
      %1002 = vmatpush.bf16.msra.mxu0 0
      %1003 = vmatpush.bf16.msra.mxu0 0
      %1004 = vmatpush.bf16.msra.mxu0 0
      %1005 = vmatpush.bf16.msra.mxu0 0
      %1006 = vmatpush.bf16.msra.mxu0 0
      %1007 = vmatpush.bf16.msra.mxu0 %v995
      %1008 = vmatmul.bf16.gmra.mxu0 %v992
      %v1009 = vpop.f32.mrf.mxu0
      %v1010 = vadd.f32 0.0, %v1009
      %v1011 = vpop.f32.mrf.mxu0
      %1012 = vdwg.mxu0
      %1013 = vmatpush.bf16.msra.mxu0 0
      %1014 = vmatpush.bf16.msra.mxu0 0
      %1015 = vmatpush.bf16.msra.mxu0 0
      %1016 = vmatpush.bf16.msra.mxu0 0
      %1017 = vmatpush.bf16.msra.mxu0 0
      %1018 = vmatpush.bf16.msra.mxu0 0
      %1019 = vmatpush.bf16.msra.mxu0 0
      %1020 = vmatpush.bf16.msra.mxu0 %v998
      %1021 = vmatmul.bf16.gmra.mxu0 %v992
      %v1022 = vpop.f32.mrf.mxu0
      %v1023 = vadd.f32 0.0, %v1022
      %v1024 = vpop.f32.mrf.mxu0
      %1025 = vdwg.mxu0
      %v1027 = vsel %vm359, %v978, 0
      %v1030 = vsel %vm363, %v976, 0
      %v1033 = vsel %vm363, %v977, 0
      %1035 = vmatpush.bf16.msra.mxu0 0
      %1036 = vmatpush.bf16.msra.mxu0 0
      %1037 = vmatpush.bf16.msra.mxu0 0
      %1038 = vmatpush.bf16.msra.mxu0 0
      %1039 = vmatpush.bf16.msra.mxu0 0
      %1040 = vmatpush.bf16.msra.mxu0 0
      %1041 = vmatpush.bf16.msra.mxu0 0
      %1042 = vmatpush.bf16.msra.mxu0 %v1030
      %1043 = vmatmul.bf16.gmra.mxu0 %v1027
      %v1044 = vpop.f32.mrf.mxu0
      %v1045 = vadd.f32 %v1010, %v1044
      %v1046 = vpop.f32.mrf.mxu0
      %1047 = vdwg.mxu0
      %1048 = vmatpush.bf16.msra.mxu0 0
      %1049 = vmatpush.bf16.msra.mxu0 0
      %1050 = vmatpush.bf16.msra.mxu0 0
      %1051 = vmatpush.bf16.msra.mxu0 0
      %1052 = vmatpush.bf16.msra.mxu0 0
      %1053 = vmatpush.bf16.msra.mxu0 0
      %1054 = vmatpush.bf16.msra.mxu0 0
      %1055 = vmatpush.bf16.msra.mxu0 %v1033
      %1056 = vmatmul.bf16.gmra.mxu0 %v1027
      %v1057 = vpop.f32.mrf.mxu0
      %v1058 = vadd.f32 %v1023, %v1057
      %v1059 = vpop.f32.mrf.mxu0
      %1060 = vdwg.mxu0
      %1061 = vrot.lane.b32.xlu0 %v966, 15
      %v1062 = vpop.permute.xlu0 %1061
      %1063 = vrot.lane.b32.xlu0 %v967, 15
      %v1064 = vpop.permute.xlu0 %1063
      %v1065 = vsel %vm440, %v1062, %v1064
      %v1066 = vsel %vm440, %v1064, %v1062
      %v1067 = vmul.f32 %v1066, %v446
      %v1068 = vmul.f32 %v1065, %v447
      %v1069 = vpack.c.bf16 %v1067, %v1067
      %v1070 = vpack.c.bf16 %v1068, %v1068
      %s1071 = scalar_lea.vmem %s5, 4
      %v1072 = vld [vmem:[%s1071] sm:$0x3]
      %v1074 = vsel %vm359, %v1072, 0
      %v1077 = vsel %vm363, %v1069, 0
      %v1080 = vsel %vm363, %v1070, 0
      %1082 = vmatpush.bf16.msra.mxu0 0
      %1083 = vmatpush.bf16.msra.mxu0 0
      %1084 = vmatpush.bf16.msra.mxu0 0
      %1085 = vmatpush.bf16.msra.mxu0 0
      %1086 = vmatpush.bf16.msra.mxu0 0
      %1087 = vmatpush.bf16.msra.mxu0 0
      %1088 = vmatpush.bf16.msra.mxu0 0
      %1089 = vmatpush.bf16.msra.mxu0 %v1077
      %1090 = vmatmul.bf16.gmra.mxu0 %v1074
      %v1091 = vpop.f32.mrf.mxu0
      %v1092 = vadd.f32 0.0, %v1091
      %v1093 = vpop.f32.mrf.mxu0
      %1094 = vdwg.mxu0
      %1095 = vmatpush.bf16.msra.mxu0 0
      %1096 = vmatpush.bf16.msra.mxu0 0
      %1097 = vmatpush.bf16.msra.mxu0 0
      %1098 = vmatpush.bf16.msra.mxu0 0
      %1099 = vmatpush.bf16.msra.mxu0 0
      %1100 = vmatpush.bf16.msra.mxu0 0
      %1101 = vmatpush.bf16.msra.mxu0 0
      %1102 = vmatpush.bf16.msra.mxu0 %v1080
      %1103 = vmatmul.bf16.gmra.mxu0 %v1074
      %v1104 = vpop.f32.mrf.mxu0
      %v1105 = vadd.f32 0.0, %v1104
      %v1106 = vpop.f32.mrf.mxu0
      %1107 = vdwg.mxu0
      %v1108 = vadd.f32 %v1045, %v1092
      %v1109 = vadd.f32 %v1058, %v1105
      %1110 = vrot.lane.b32.xlu0 %v966, 1
      %v1111 = vpop.permute.xlu0 %1110
      %1112 = vrot.lane.b32.xlu0 %v967, 1
      %v1113 = vpop.permute.xlu0 %1112
      %v1114 = vsel %vm502, %v1111, %v1113
      %v1115 = vsel %vm502, %v1113, %v1111
      %v1116 = vmul.f32 %v1115, %v508
      %v1117 = vmul.f32 %v1114, %v509
      %v1118 = vpack.c.bf16 %v1116, %v1116
      %v1119 = vpack.c.bf16 %v1117, %v1117
      %s1120 = scalar_lea.vmem %s5, 6
      %v1121 = vld [vmem:[%s1120] sm:$0x3]
      %v1123 = vsel %vm359, %v1121, 0
      %v1126 = vsel %vm363, %v1118, 0
      %v1129 = vsel %vm363, %v1119, 0
      %1131 = vmatpush.bf16.msra.mxu0 0
      %1132 = vmatpush.bf16.msra.mxu0 0
      %1133 = vmatpush.bf16.msra.mxu0 0
      %1134 = vmatpush.bf16.msra.mxu0 0
      %1135 = vmatpush.bf16.msra.mxu0 0
      %1136 = vmatpush.bf16.msra.mxu0 0
      %1137 = vmatpush.bf16.msra.mxu0 0
      %1138 = vmatpush.bf16.msra.mxu0 %v1126
      %1139 = vmatmul.bf16.gmra.mxu0 %v1123
      %v1140 = vpop.f32.mrf.mxu0
      %v1141 = vadd.f32 0.0, %v1140
      %v1142 = vpop.f32.mrf.mxu0
      %1143 = vdwg.mxu0
      %1144 = vmatpush.bf16.msra.mxu0 0
      %1145 = vmatpush.bf16.msra.mxu0 0
      %1146 = vmatpush.bf16.msra.mxu0 0
      %1147 = vmatpush.bf16.msra.mxu0 0
      %1148 = vmatpush.bf16.msra.mxu0 0
      %1149 = vmatpush.bf16.msra.mxu0 0
      %1150 = vmatpush.bf16.msra.mxu0 0
      %1151 = vmatpush.bf16.msra.mxu0 %v1129
      %1152 = vmatmul.bf16.gmra.mxu0 %v1123
      %v1153 = vpop.f32.mrf.mxu0
      %v1154 = vadd.f32 0.0, %v1153
      %v1155 = vpop.f32.mrf.mxu0
      %1156 = vdwg.mxu0
      %v1157 = vadd.f32 %v1108, %v1141
      %v1158 = vadd.f32 %v1109, %v1154
      %v1159 = vmul.f32 %v966, %v558
      %v1160 = vmul.f32 %v967, %v559
      %v1161 = vpack.c.bf16 %v1159, %v1159
      %v1162 = vpack.c.bf16 %v1160, %v1160
      %s1163 = scalar_lea.vmem %s5, 8
      %v1164 = vld [vmem:[%s1163] sm:$0x3]
      %v1166 = vsel %vm359, %v1164, 0
      %v1169 = vsel %vm363, %v1161, 0
      %v1172 = vsel %vm363, %v1162, 0
      %1174 = vmatpush.bf16.msra.mxu0 0
      %1175 = vmatpush.bf16.msra.mxu0 0
      %1176 = vmatpush.bf16.msra.mxu0 0
      %1177 = vmatpush.bf16.msra.mxu0 0
      %1178 = vmatpush.bf16.msra.mxu0 0
      %1179 = vmatpush.bf16.msra.mxu0 0
      %1180 = vmatpush.bf16.msra.mxu0 0
      %1181 = vmatpush.bf16.msra.mxu0 %v1169
      %1182 = vmatmul.bf16.gmra.mxu0 %v1166
      %v1183 = vpop.f32.mrf.mxu0
      %v1184 = vadd.f32 0.0, %v1183
      %v1185 = vpop.f32.mrf.mxu0
      %1186 = vdwg.mxu0
      %1187 = vmatpush.bf16.msra.mxu0 0
      %1188 = vmatpush.bf16.msra.mxu0 0
      %1189 = vmatpush.bf16.msra.mxu0 0
      %1190 = vmatpush.bf16.msra.mxu0 0
      %1191 = vmatpush.bf16.msra.mxu0 0
      %1192 = vmatpush.bf16.msra.mxu0 0
      %1193 = vmatpush.bf16.msra.mxu0 0
      %1194 = vmatpush.bf16.msra.mxu0 %v1172
      %1195 = vmatmul.bf16.gmra.mxu0 %v1166
      %v1196 = vpop.f32.mrf.mxu0
      %v1197 = vadd.f32 0.0, %v1196
      %v1198 = vpop.f32.mrf.mxu0
      %1199 = vdwg.mxu0
      %v1200 = vadd.f32 %v1157, %v1184
      %v1201 = vadd.f32 %v1158, %v1197
      %1202 = vrot.lane.b32.xlu0 %v966, 127
      %v1203 = vpop.permute.xlu0 %1202
      %1204 = vrot.lane.b32.xlu0 %v967, 127
      %v1205 = vpop.permute.xlu0 %1204
      %v1206 = vsel %vm623, %v1203, %v1205
      %v1207 = vsel %vm623, %v1205, %v1203
      %v1208 = vmul.f32 %v1206, %v629
      %v1209 = vmul.f32 %v1207, %v630
      %v1210 = vpack.c.bf16 %v1208, %v1208
      %v1211 = vpack.c.bf16 %v1209, %v1209
      %s1212 = scalar_lea.vmem %s5, 10
      %v1213 = vld [vmem:[%s1212] sm:$0x3]
      %v1215 = vsel %vm359, %v1213, 0
      %v1218 = vsel %vm363, %v1210, 0
      %v1221 = vsel %vm363, %v1211, 0
      %1223 = vmatpush.bf16.msra.mxu0 0
      %1224 = vmatpush.bf16.msra.mxu0 0
      %1225 = vmatpush.bf16.msra.mxu0 0
      %1226 = vmatpush.bf16.msra.mxu0 0
      %1227 = vmatpush.bf16.msra.mxu0 0
      %1228 = vmatpush.bf16.msra.mxu0 0
      %1229 = vmatpush.bf16.msra.mxu0 0
      %1230 = vmatpush.bf16.msra.mxu0 %v1218
      %1231 = vmatmul.bf16.gmra.mxu0 %v1215
      %v1232 = vpop.f32.mrf.mxu0
      %v1233 = vadd.f32 0.0, %v1232
      %v1234 = vpop.f32.mrf.mxu0
      %1235 = vdwg.mxu0
      %1236 = vmatpush.bf16.msra.mxu0 0
      %1237 = vmatpush.bf16.msra.mxu0 0
      %1238 = vmatpush.bf16.msra.mxu0 0
      %1239 = vmatpush.bf16.msra.mxu0 0
      %1240 = vmatpush.bf16.msra.mxu0 0
      %1241 = vmatpush.bf16.msra.mxu0 0
      %1242 = vmatpush.bf16.msra.mxu0 0
      %1243 = vmatpush.bf16.msra.mxu0 %v1221
      %1244 = vmatmul.bf16.gmra.mxu0 %v1215
      %v1245 = vpop.f32.mrf.mxu0
      %v1246 = vadd.f32 0.0, %v1245
      %v1247 = vpop.f32.mrf.mxu0
      %1248 = vdwg.mxu0
      %v1249 = vadd.f32 %v1200, %v1233
      %v1250 = vadd.f32 %v1201, %v1246
      %1251 = vrot.lane.b32.xlu0 %v966, 113
      %v1252 = vpop.permute.xlu0 %1251
      %1253 = vrot.lane.b32.xlu0 %v967, 113
      %v1254 = vpop.permute.xlu0 %1253
      %v1255 = vsel %vm685, %v1252, %v1254
      %v1256 = vsel %vm685, %v1254, %v1252
      %v1257 = vmul.f32 %v1255, %v691
      %v1258 = vmul.f32 %v1256, %v692
      %v1259 = vpack.c.bf16 %v1257, %v1257
      %v1260 = vpack.c.bf16 %v1258, %v1258
      %s1261 = scalar_lea.vmem %s5, 12
      %v1262 = vld [vmem:[%s1261] sm:$0x3]
      %v1264 = vsel %vm359, %v1262, 0
      %v1267 = vsel %vm363, %v1259, 0
      %v1270 = vsel %vm363, %v1260, 0
      %1272 = vmatpush.bf16.msra.mxu0 0
      %1273 = vmatpush.bf16.msra.mxu0 0
      %1274 = vmatpush.bf16.msra.mxu0 0
      %1275 = vmatpush.bf16.msra.mxu0 0
      %1276 = vmatpush.bf16.msra.mxu0 0
      %1277 = vmatpush.bf16.msra.mxu0 0
      %1278 = vmatpush.bf16.msra.mxu0 0
      %1279 = vmatpush.bf16.msra.mxu0 %v1267
      %1280 = vmatmul.bf16.gmra.mxu0 %v1264
      %v1281 = vpop.f32.mrf.mxu0
      %v1282 = vadd.f32 0.0, %v1281
      %v1283 = vpop.f32.mrf.mxu0
      %1284 = vdwg.mxu0
      %1285 = vmatpush.bf16.msra.mxu0 0
      %1286 = vmatpush.bf16.msra.mxu0 0
      %1287 = vmatpush.bf16.msra.mxu0 0
      %1288 = vmatpush.bf16.msra.mxu0 0
      %1289 = vmatpush.bf16.msra.mxu0 0
      %1290 = vmatpush.bf16.msra.mxu0 0
      %1291 = vmatpush.bf16.msra.mxu0 0
      %1292 = vmatpush.bf16.msra.mxu0 %v1270
      %1293 = vmatmul.bf16.gmra.mxu0 %v1264
      %v1294 = vpop.f32.mrf.mxu0
      %v1295 = vadd.f32 0.0, %v1294
      %v1296 = vpop.f32.mrf.mxu0
      %1297 = vdwg.mxu0
      %v1298 = vadd.f32 %v1249, %v1282
      %v1299 = vadd.f32 %v1250, %v1295
      %1300 = vrot.lane.b32.xlu0 %v966, 112
      %v1301 = vpop.permute.xlu0 %1300
      %1302 = vrot.lane.b32.xlu0 %v967, 112
      %v1303 = vpop.permute.xlu0 %1302
      %v1304 = vsel %vm747, %v1301, %v1303
      %v1305 = vsel %vm747, %v1303, %v1301
      %v1306 = vmul.f32 %v1304, %v753
      %v1307 = vmul.f32 %v1305, %v754
      %v1308 = vpack.c.bf16 %v1306, %v1306
      %v1309 = vpack.c.bf16 %v1307, %v1307
      %s1310 = scalar_lea.vmem %s5, 14
      %v1311 = vld [vmem:[%s1310] sm:$0x3]
      %v1313 = vsel %vm359, %v1311, 0
      %v1316 = vsel %vm363, %v1308, 0
      %v1319 = vsel %vm363, %v1309, 0
      %1321 = vmatpush.bf16.msra.mxu0 0
      %1322 = vmatpush.bf16.msra.mxu0 0
      %1323 = vmatpush.bf16.msra.mxu0 0
      %1324 = vmatpush.bf16.msra.mxu0 0
      %1325 = vmatpush.bf16.msra.mxu0 0
      %1326 = vmatpush.bf16.msra.mxu0 0
      %1327 = vmatpush.bf16.msra.mxu0 0
      %1328 = vmatpush.bf16.msra.mxu0 %v1316
      %1329 = vmatmul.bf16.gmra.mxu0 %v1313
      %v1330 = vpop.f32.mrf.mxu0
      %v1331 = vadd.f32 0.0, %v1330
      %v1332 = vpop.f32.mrf.mxu0
      %1333 = vdwg.mxu0
      %1334 = vmatpush.bf16.msra.mxu0 0
      %1335 = vmatpush.bf16.msra.mxu0 0
      %1336 = vmatpush.bf16.msra.mxu0 0
      %1337 = vmatpush.bf16.msra.mxu0 0
      %1338 = vmatpush.bf16.msra.mxu0 0
      %1339 = vmatpush.bf16.msra.mxu0 0
      %1340 = vmatpush.bf16.msra.mxu0 0
      %1341 = vmatpush.bf16.msra.mxu0 %v1319
      %1342 = vmatmul.bf16.gmra.mxu0 %v1313
      %v1343 = vpop.f32.mrf.mxu0
      %v1344 = vadd.f32 0.0, %v1343
      %v1345 = vpop.f32.mrf.mxu0
      %1346 = vdwg.mxu0
      %v1347 = vadd.f32 %v1298, %v1331
      %v1348 = vadd.f32 %v1299, %v1344
      %1349 = vrot.lane.b32.xlu0 %v966, 111
      %v1350 = vpop.permute.xlu0 %1349
      %1351 = vrot.lane.b32.xlu0 %v967, 111
      %v1352 = vpop.permute.xlu0 %1351
      %v1353 = vsel %vm809, %v1350, %v1352
      %v1354 = vsel %vm809, %v1352, %v1350
      %v1355 = vmul.f32 %v1353, %v815
      %v1356 = vmul.f32 %v1354, %v816
      %v1357 = vpack.c.bf16 %v1355, %v1355
      %v1358 = vpack.c.bf16 %v1356, %v1356
      %s1359 = scalar_lea.vmem %s5, 16
      %v1360 = vld [vmem:[%s1359] sm:$0x3]
      %v1362 = vsel %vm359, %v1360, 0
      %v1365 = vsel %vm363, %v1357, 0
      %v1368 = vsel %vm363, %v1358, 0
      %1370 = vmatpush.bf16.msra.mxu0 0
      %1371 = vmatpush.bf16.msra.mxu0 0
      %1372 = vmatpush.bf16.msra.mxu0 0
      %1373 = vmatpush.bf16.msra.mxu0 0
      %1374 = vmatpush.bf16.msra.mxu0 0
      %1375 = vmatpush.bf16.msra.mxu0 0
      %1376 = vmatpush.bf16.msra.mxu0 0
      %1377 = vmatpush.bf16.msra.mxu0 %v1365
      %1378 = vmatmul.bf16.gmra.mxu0 %v1362
      %v1379 = vpop.f32.mrf.mxu0
      %v1380 = vadd.f32 0.0, %v1379
      %v1381 = vpop.f32.mrf.mxu0
      %1382 = vdwg.mxu0
      %1383 = vmatpush.bf16.msra.mxu0 0
      %1384 = vmatpush.bf16.msra.mxu0 0
      %1385 = vmatpush.bf16.msra.mxu0 0
      %1386 = vmatpush.bf16.msra.mxu0 0
      %1387 = vmatpush.bf16.msra.mxu0 0
      %1388 = vmatpush.bf16.msra.mxu0 0
      %1389 = vmatpush.bf16.msra.mxu0 0
      %1390 = vmatpush.bf16.msra.mxu0 %v1368
      %1391 = vmatmul.bf16.gmra.mxu0 %v1362
      %v1392 = vpop.f32.mrf.mxu0
      %v1393 = vadd.f32 0.0, %v1392
      %v1394 = vpop.f32.mrf.mxu0
      %1395 = vdwg.mxu0
      %v1396 = vadd.f32 %v1347, %v1380
      %v1397 = vadd.f32 %v1348, %v1393
      %v1398 = vsel %vm563, %v1396, 0.0
      %v1399 = vsel %vm563, %v1397, 0.0
      %v1400 = vadd.f32 %v1398, %v1399
      %1401 = vadd.xlane.f32.xlu0 %v1400
      %v1402 = vpop.xlane.xlu0 %1401
      %v1403 = vsel %vm563, %v1402, 0.0
      %v1404 = vrot.slane %v1403, 4
      %v1405 = vadd.f32 %v1403, %v1404
      %v1406 = vrot.slane %v1405, 2
      %v1407 = vadd.f32 %v1405, %v1406
      %v1408 = vrot.slane %v1407, 1
      %v1409 = vadd.f32 %v1407, %v1408
      %v1410 = vmul.f32 %v1409, %v880
      %v1411 = vsub.f32 %v1396, %v1410
      %v1412 = vsub.f32 %v1397, %v1410
      %v1413 = vmul.f32 %v1411, %v1411
      %v1414 = vmul.f32 %v1412, %v1412
      %v1415 = vsel %vm563, %v1413, 0.0
      %v1416 = vsel %vm563, %v1414, 0.0
      %v1417 = vadd.f32 %v1415, %v1416
      %1418 = vadd.xlane.f32.xlu0 %v1417
      %v1419 = vpop.xlane.xlu0 %1418
      %v1420 = vsel %vm563, %v1419, 0.0
      %v1421 = vrot.slane %v1420, 4
      %v1422 = vadd.f32 %v1420, %v1421
      %v1423 = vrot.slane %v1422, 2
      %v1424 = vadd.f32 %v1422, %v1423
      %v1425 = vrot.slane %v1424, 1
      %v1426 = vadd.f32 %v1424, %v1425
      %v1427 = vmul.f32 %v1426, %v880
      %v1428 = vadd.f32 %v1427, 1e-05
      %v1429 = vrsqrt.pop %v1428
      %v1430 = vmul.f32 %v1429, %v1428
      %v1431 = vmul.f32 %v1430, %v1429
      %v1432 = vmul.f32 0.5, %v1431
      %v1433 = vsub.f32 1.5, %v1432
      %v1434 = vmul.f32 %v1429, %v1433
      %vm1435 = vweird.f32 %v1428
      %vm1436 = vweird.f32 %v1429
      %vm1437 = vmor %vm1435, %vm1436
      %v1438 = vsel %vm1437, %v1429, %v1434
      %v1439 = vmul.f32 %v1411, %v1438
      %v1440 = vmul.f32 %v1412, %v1438
      %v1441 = vld [vmem:[%s6] sm:$0xf]
      %1443 = vset.pattern.permute.xlu0 0
      %1444 = vperm.xlu0 %1443, %v1441
      %v1445 = vpop.permute.xlu0 %1444
      %v1447 = vmul.f32 %v1439, %v1445
      %v1448 = vmul.f32 %v1440, %v1445
      %v1449 = vld [vmem:[%s7] sm:$0xf]
      %1451 = vset.pattern.permute.xlu0 0
      %1452 = vperm.xlu0 %1451, %v1449
      %v1453 = vpop.permute.xlu0 %1452
      %v1455 = vadd.f32 %v1447, %v1453
      %v1456 = vadd.f32 %v1448, %v1453
      %1457 = vst [vmem:[#allocation1] ss:$2 sm:$0xff] %v307
      %v1458 = vld.sshfl [vmem:[#allocation1] sm:$0xff pattern:$0x75316420]
      %v1459 = vld.sshfl [vmem:[#allocation1 + $0x8] sm:$0xff pattern:$0x75316420]
      %v1462 = vadd.f32 %v1455, %v1458
      %v1463 = vadd.f32 %v1456, %v1459
      %v1464 = vxor.u32 %v1462, 2147483648
      %v1465 = vxor.u32 %v1463, 2147483648
      %v1466 = vmul.f32 %v1464, 1.442695
      %v1467 = vpow.pop %v1466
      %v1468 = vmul.f32 %v1465, 1.442695
      %v1469 = vpow.pop %v1468
      %v1470 = vadd.f32 %v1467, 1.0
      %v1471 = vadd.f32 %v1469, 1.0
      %v1472 = vrcp.pop %v1470
      %v1473 = vmul.f32 %v1470, %v1472
      %v1474 = vsub.f32 1.0, %v1473
      %v1475 = vmul.f32 %v1472, %v1474
      %v1476 = vadd.f32 %v1472, %v1475
      %vm1477 = vweird.f32 %v1470
      %vm1478 = vweird.f32 %v1472
      %vm1479 = vmor %vm1477, %vm1478
      %v1480 = vsel %vm1479, %v1472, %v1476
      %v1481 = vand.u32 2147483647, %v1470
      %vm1482 = vcmp.eq.f32.partialorder %v1481, 8.507059e+37
      %v1483 = vand.u32 %v1470, 2147483648
      %v1484 = vor.u32 1.1754944e-38, %v1483
      %v1485 = vsel %vm1482, %v1484, %v1480
      %v1486 = vmul.f32 1.0, %v1485
      %v1487 = vrcp.pop %v1471
      %v1488 = vmul.f32 %v1471, %v1487
      %v1489 = vsub.f32 1.0, %v1488
      %v1490 = vmul.f32 %v1487, %v1489
      %v1491 = vadd.f32 %v1487, %v1490
      %vm1492 = vweird.f32 %v1471
      %vm1493 = vweird.f32 %v1487
      %vm1494 = vmor %vm1492, %vm1493
      %v1495 = vsel %vm1494, %v1487, %v1491
      %v1496 = vand.u32 2147483647, %v1471
      %vm1497 = vcmp.eq.f32.partialorder %v1496, 8.507059e+37
      %v1498 = vand.u32 %v1471, 2147483648
      %v1499 = vor.u32 1.1754944e-38, %v1498
      %v1500 = vsel %vm1497, %v1499, %v1495
      %v1501 = vmul.f32 1.0, %v1500
      %v1502 = vmul.f32 %v1462, %v1486
      %v1503 = vmul.f32 %v1463, %v1501
      %v1506 = vrot.slane %v1503, 4
      %v1507 = vsel %vm563, %v1502, %v1506
      %1509 = vst [vmem:[%s305] sm:$0xff] %v1507
      %p1510 = scmp.lt.s32.totalorder %s19, 1
      %s1511 = scalar_select %p1510, %s19, 1
      %s1512 = smul.addr %s1511, 2
      %s1513 = smul.addr %s1512, 4
      %s1514 = scalar_lea.vmem %s8, %s1513
      // Predicated region
      $region53: #{resnet_block_forward.1} parent=51 // pred_check
        %p1515 = pneg %p210
      $region54: #{resnet_block_forward.1} parent=51 // pred_check_branch
        %1517 = sbr.rel (%p1515) target = $region56
      $region55: #{resnet_block_forward.1} parent=51 // pred_region
        _
      $region56: #{resnet_block_forward.1} parent=51 // pred_fallthru
        _
    $region52: #{resnet_block_forward.1} parent=5 // pred_fallthru
      _
    %p1518 = scmp.le.s32.totalorder 2, %s14
    // Predicated region
    $region57: #{resnet_block_forward.1} parent=5 // pred_check
      %p1519 = pneg %p1518
    $region58: #{resnet_block_forward.1} parent=5 // pred_check_branch
      %1521 = sbr.rel (%p1519) target = $region60
    $region59: #{resnet_block_forward.1} parent=5 // pred_region
      %s1522 = ssub.s32 %s14, 2
      // Predicated region
      $region61: #{resnet_block_forward.1} parent=59 // pred_check
        %p1523 = pneg %p216
      $region62: #{resnet_block_forward.1} parent=59 // pred_check_branch
        %1525 = sbr.rel (%p1523) target = $region64
      $region63: #{resnet_block_forward.1} parent=59 // pred_region
        %p1526 = scmp.lt.s32.totalorder %s20, 1
        %s1527 = scalar_select %p1526, %s20, 1
        %s1528 = smul.addr %s1527, 2
        %s1529 = smul.addr %s1528, 4
        %s1530 = scalar_lea.vmem %s8, %s1529
      $region64: #{resnet_block_forward.1} parent=59 // pred_fallthru
        _
    $region60: #{resnet_block_forward.1} parent=5 // pred_fallthru
      _
  $region6: #{resnet_block_forward.1} parent=0 // loop_footer
    %s18 = sadd.s32 1, %s14
  $region7: #{resnet_block_forward.1} parent=0 // loop_footer_branch
    %13 = sbr.rel target = $region3
  $region8: #{resnet_block_forward.1} parent=0 // loop_exit
    _

</llo_original>
